<compile_context>
chip_gen: v6e
topology: v6e:2x2x1
jax: 0.10.0
libtpu: 0.0.40
codegen_flags: <defaults>
</compile_context>

<pallas_src>
import functools

import jax
import jax.numpy as jnp
from jax import lax
from jax.experimental import pallas as pl
from jax.experimental.pallas import tpu as pltpu


_LN_EPS = 1e-5
_INV_SQRT2 = 0.7071067811865476


def _round_up(x, m):
    return ((x + m - 1) // m) * m


@functools.lru_cache(maxsize=1)
def _vmem_cap_bytes():
    # Chip-aware physical VMEM (v5e/v6e: 128 MiB, v7x: 64 MiB). Conservative fallback.
    try:
        return int(pltpu.get_tpu_info().vmem_capacity_bytes)
    except Exception:
        return 64 << 20


def _choose_block_rows(n, block_rows):
    # Multiple of 8 sublanes; large by default (amortize ~0.35us/step grid overhead), but
    # capped so the grid keeps >= ~4 steps when possible (v7x: 2 TCs x pipelining).
    four_step_cap = _round_up(-(-n // 4), 8)
    br = min(block_rows, max(four_step_cap, 8))
    return min(_round_up(br, 8), _round_up(n, 8))


def _layer_norm(h, gamma, beta):
    # Centered two-pass statistics (biased variance), matching PyTorch nn.LayerNorm.
    mu = jnp.mean(h, axis=-1, keepdims=True)
    d = h - mu
    var = jnp.mean(d * d, axis=-1, keepdims=True)
    return d * lax.rsqrt(var + _LN_EPS) * gamma + beta


def residual_block_kernel(x_ref, w1_ref, p1_ref, w2_ref, p2_ref, o_ref):
    # p1: (3, H) = [b1; ln1_gamma; ln1_beta], p2: (3, D) = [b2; ln2_gamma; ln2_beta]
    p1 = p1_ref[...]
    p2 = p2_ref[...]

    # Linear(input_dim -> hidden_dim): bf16 MXU operands, f32 accumulation.
    h = jnp.dot(x_ref[...].astype(jnp.bfloat16), w1_ref[...],
                preferred_element_type=jnp.float32) + p1[0:1, :]
    # LayerNorm(hidden_dim) in f32.
    h = _layer_norm(h, p1[1:2, :], p1[2:3, :])
    # GELU (exact, erf-based — PyTorch nn.GELU() default).
    h = 0.5 * h * (1.0 + lax.erf(h * _INV_SQRT2))
    # Dropout(p=0.3) — identity in eval mode.

    # Linear(hidden_dim -> input_dim): bf16 MXU operands, f32 accumulation.
    y = jnp.dot(h.astype(jnp.bfloat16), w2_ref[...],
                preferred_element_type=jnp.float32) + p2[0:1, :]
    # LayerNorm(input_dim) in f32.
    y = _layer_norm(y, p2[1:2, :], p2[2:3, :])

    # Residual add: re-read x from the VMEM tile here (cheap vld) instead of holding an
    # f32 copy live across both matmuls/LayerNorms/GELU.
    o_ref[...] = (x_ref[...].astype(jnp.float32) + y).astype(o_ref.dtype)


def prepare_params(params):
    """One-time (call OUTSIDE jit / per-step loops): bf16 MXU weights + packed small params."""
    return {
        "w1": params["w1"].astype(jnp.bfloat16),
        "w2": params["w2"].astype(jnp.bfloat16),
        "p1": jnp.concatenate(
            [params["b1"], params["ln1_g"], params["ln1_b"]], axis=0).astype(jnp.float32),
        "p2": jnp.concatenate(
            [params["b2"], params["ln2_g"], params["ln2_b"]], axis=0).astype(jnp.float32),
    }


@functools.partial(jax.jit, static_argnames=("block_rows",))
def residual_block(x, kparams, block_rows=512):
    """x: [..., D]; kparams from prepare_params(). Leading dims are flattened into rows."""
    orig_shape = x.shape
    D = orig_shape[-1]
    x2 = x.reshape(-1, D)
    N = x2.shape[0]
    H = kparams["w1"].shape[1]

    br = _choose_block_rows(N, block_rows)
    grid = (pl.cdiv(N, br),)

    row_spec = pl.BlockSpec((br, D), lambda i: (i, 0))
    # Constant-index operands fetched once -> single buffer.
    const = lambda shape: pl.BlockSpec(shape, lambda i: (0, 0),
                                       pipeline_mode=pl.Buffered(1))

    # Explicit VMEM budget: double-buffered x/out row tiles + single-buffered bf16 weights
    # and packed params + f32 intermediates, with headroom; capped at ~80% of physical VMEM.
    itemsize = jnp.dtype(x.dtype).itemsize
    io_bytes = 2 * (2 * br * D * itemsize)      # x + out tiles, double-buffered
    w_bytes = (D * H + H * D) * 2               # bf16 weights, single-buffered (Buffered(1))
    small_bytes = (3 * H + 3 * D) * 4           # packed bias/LN params, single-buffered
    interm_bytes = 4 * br * max(D, H) * 4       # h/y temporaries in f32
    est = int(1.5 * (io_bytes + w_bytes + small_bytes + interm_bytes)) + (8 << 20)
    cap = int(0.8 * _vmem_cap_bytes())
    vmem_limit = int(min(max(est, 32 << 20), cap))

    out = pl.pallas_call(
        residual_block_kernel,
        out_shape=jax.ShapeDtypeStruct((N, D), x.dtype),
        grid_spec=pltpu.PrefetchScalarGridSpec(
            num_scalar_prefetch=0,
            grid=grid,
            in_specs=[
                row_spec,          # x rows
                const((D, H)),     # w1 (bf16)
                const((3, H)),     # packed b1 / ln1_gamma / ln1_beta
                const((H, D)),     # w2 (bf16)
                const((3, D)),     # packed b2 / ln2_gamma / ln2_beta
            ],
            out_specs=row_spec,
        ),
        compiler_params=pltpu.CompilerParams(
            dimension_semantics=("parallel",),
            vmem_limit_bytes=vmem_limit,
        ),
    )(x2, kparams["w1"], kparams["p1"], kparams["w2"], kparams["p2"])

    return out.reshape(orig_shape)


def init_params(key, input_dim, hidden_dim, dtype=jnp.float32):
    k1, k2, k3, k4 = jax.random.split(key, 4)
    # Deterministic synthetic init (roughly PyTorch Linear scale).
    lim1 = 1.0 / jnp.sqrt(input_dim)
    lim2 = 1.0 / jnp.sqrt(hidden_dim)
    return {
        "w1": jax.random.uniform(k1, (input_dim, hidden_dim), dtype, -lim1, lim1),
        "b1": jax.random.uniform(k2, (1, hidden_dim), dtype, -lim1, lim1),
        "ln1_g": jnp.ones((1, hidden_dim), dtype),   # PyTorch LayerNorm default
        "ln1_b": jnp.zeros((1, hidden_dim), dtype),
        "w2": jax.random.uniform(k3, (hidden_dim, input_dim), dtype, -lim2, lim2),
        "b2": jax.random.uniform(k4, (1, input_dim), dtype, -lim2, lim2),
        "ln2_g": jnp.ones((1, input_dim), dtype),
        "ln2_b": jnp.zeros((1, input_dim), dtype),
    }


def residual_block_ref(x, p):
    """Pure-JAX f32 reference (PyTorch-faithful) for correctness checking."""
    h = x @ p["w1"] + p["b1"]
    h = _layer_norm(h, p["ln1_g"], p["ln1_b"])
    h = 0.5 * h * (1.0 + lax.erf(h * _INV_SQRT2))
    y = h @ p["w2"] + p["b2"]
    y = _layer_norm(y, p["ln2_g"], p["ln2_b"])
    return x + y


if __name__ == "__main__":
    # Lane-dense feature dims (multiples of 128); N = 512 rows -> 4 row tiles of 128.
    input_dim, hidden_dim = 128, 256
    batch, seq = 4, 128

    key = jax.random.PRNGKey(0)
    kx, kp = jax.random.split(key)
    x = jax.random.normal(kx, (batch, seq, input_dim), jnp.float32)
    params = init_params(kp, input_dim, hidden_dim)
    kparams = prepare_params(params)   # one-time bf16 cast + packing, outside jit

    out = jax.block_until_ready(residual_block(x, kparams))

    ref = residual_block_ref(x.reshape(-1, input_dim), params).reshape(x.shape)
    assert out.shape == x.shape and out.dtype == x.dtype
    max_err = float(jnp.max(jnp.abs(out - ref)))
    # Tolerance covers the intentional bf16 MXU operands (f32 accumulation) vs f32 reference.
    assert jnp.allclose(out, ref, atol=5e-2, rtol=5e-2), f"max abs err {max_err}"

    print("KERNEL_OK")
</pallas_src>

<mosaic_0001>
module attributes {stable_mosaic.version = 11 : i64} {
  func.func @residual_block_kernel(%arg0: i32, %arg1: memref<128x128xf32, #tpu.memory_space<vmem>>, %arg2: memref<128x256xbf16, #tpu.memory_space<vmem>>, %arg3: memref<3x256xf32, #tpu.memory_space<vmem>>, %arg4: memref<256x128xbf16, #tpu.memory_space<vmem>>, %arg5: memref<3x128xf32, #tpu.memory_space<vmem>>, %arg6: memref<128x128xf32, #tpu.memory_space<vmem>>) attributes {dimension_semantics = [#tpu.dimension_semantics<parallel>], iteration_bounds = array<i64: 4>, scalar_prefetch = 0 : i64, scratch_operands = 0 : i64, tpu.core_type = #tpu.core_type<tc>, window_params = [{transform_indices = @transform_0, window_bounds = array<i64: 128, 128>}, {pipeline_mode = #tpu.pipeline_mode<synchronous>, transform_indices = @transform_1, window_bounds = array<i64: 128, 256>}, {pipeline_mode = #tpu.pipeline_mode<synchronous>, transform_indices = @transform_2, window_bounds = array<i64: 3, 256>}, {pipeline_mode = #tpu.pipeline_mode<synchronous>, transform_indices = @transform_3, window_bounds = array<i64: 256, 128>}, {pipeline_mode = #tpu.pipeline_mode<synchronous>, transform_indices = @transform_4, window_bounds = array<i64: 3, 128>}, {transform_indices = @transform_5, window_bounds = array<i64: 128, 128>}]} {
    %c0 = arith.constant 0 : index
    %c0_0 = arith.constant 0 : index
    %0 = vector.load %arg3[%c0, %c0_0] : memref<3x256xf32, #tpu.memory_space<vmem>>, vector<3x256xf32>
    %c0_1 = arith.constant 0 : index
    %c0_2 = arith.constant 0 : index
    %1 = vector.load %arg5[%c0_1, %c0_2] : memref<3x128xf32, #tpu.memory_space<vmem>>, vector<3x128xf32>
    %c0_3 = arith.constant 0 : index
    %c0_4 = arith.constant 0 : index
    %2 = vector.load %arg1[%c0_3, %c0_4] : memref<128x128xf32, #tpu.memory_space<vmem>>, vector<128x128xf32>
    %3 = arith.truncf %2 : vector<128x128xf32> to vector<128x128xbf16>
    %c0_5 = arith.constant 0 : index
    %c0_6 = arith.constant 0 : index
    %4 = vector.load %arg2[%c0_5, %c0_6] : memref<128x256xbf16, #tpu.memory_space<vmem>>, vector<128x256xbf16>
    %cst = arith.constant dense<0.000000e+00> : vector<128x256xf32>
    %5 = tpu.matmul %3, %4, %cst {dimension_numbers = #tpu.dot_dimension_numbers<[1], [0], [0], [1], [0, 0, 1, 1], [], []>} : vector<128x128xbf16>, vector<128x256xbf16>, vector<128x256xf32> -> vector<128x256xf32>
    %6 = vector.extract_strided_slice %0 {offsets = [0, 0], sizes = [1, 256], strides = [1, 1]} : vector<3x256xf32> to vector<1x256xf32>
    %7 = vector.broadcast %6 : vector<1x256xf32> to vector<128x256xf32>
    %8 = arith.addf %5, %7 : vector<128x256xf32>
    %9 = vector.extract_strided_slice %0 {offsets = [1, 0], sizes = [1, 256], strides = [1, 1]} : vector<3x256xf32> to vector<1x256xf32>
    %10 = vector.extract_strided_slice %0 {offsets = [2, 0], sizes = [1, 256], strides = [1, 1]} : vector<3x256xf32> to vector<1x256xf32>
    %cst_7 = arith.constant dense<0.000000e+00> : vector<128xf32>
    %11 = vector.multi_reduction <add>, %8, %cst_7 [1] : vector<128x256xf32> to vector<128xf32>
    %12 = vector.shape_cast %11 : vector<128xf32> to vector<128x1xf32>
    %cst_8 = arith.constant 2.560000e+02 : f32
    %13 = vector.broadcast %cst_8 : f32 to vector<128x1xf32>
    %14 = arith.divf %12, %13 : vector<128x1xf32>
    %15 = vector.broadcast %14 : vector<128x1xf32> to vector<128x256xf32>
    %16 = arith.subf %8, %15 : vector<128x256xf32>
    %17 = arith.mulf %16, %16 : vector<128x256xf32>
    %cst_9 = arith.constant dense<0.000000e+00> : vector<128xf32>
    %18 = vector.multi_reduction <add>, %17, %cst_9 [1] : vector<128x256xf32> to vector<128xf32>
    %19 = vector.shape_cast %18 : vector<128xf32> to vector<128x1xf32>
    %cst_10 = arith.constant 2.560000e+02 : f32
    %20 = vector.broadcast %cst_10 : f32 to vector<128x1xf32>
    %21 = arith.divf %19, %20 : vector<128x1xf32>
    %cst_11 = arith.constant 9.99999974E-6 : f32
    %22 = vector.broadcast %cst_11 : f32 to vector<128x1xf32>
    %23 = arith.addf %21, %22 : vector<128x1xf32>
    %24 = math.rsqrt %23 : vector<128x1xf32>
    %25 = vector.broadcast %24 : vector<128x1xf32> to vector<128x256xf32>
    %26 = arith.mulf %16, %25 : vector<128x256xf32>
    %27 = vector.broadcast %9 : vector<1x256xf32> to vector<128x256xf32>
    %28 = arith.mulf %26, %27 : vector<128x256xf32>
    %29 = vector.broadcast %10 : vector<1x256xf32> to vector<128x256xf32>
    %30 = arith.addf %28, %29 : vector<128x256xf32>
    %cst_12 = arith.constant 5.000000e-01 : f32
    %31 = vector.broadcast %cst_12 : f32 to vector<128x256xf32>
    %32 = arith.mulf %31, %30 : vector<128x256xf32>
    %cst_13 = arith.constant 0.707106769 : f32
    %33 = vector.broadcast %cst_13 : f32 to vector<128x256xf32>
    %34 = arith.mulf %30, %33 : vector<128x256xf32>
    %35 = math.erf %34 : vector<128x256xf32>
    %cst_14 = arith.constant 1.000000e+00 : f32
    %36 = vector.broadcast %cst_14 : f32 to vector<128x256xf32>
    %37 = arith.addf %36, %35 : vector<128x256xf32>
    %38 = arith.mulf %32, %37 : vector<128x256xf32>
    %39 = arith.truncf %38 : vector<128x256xf32> to vector<128x256xbf16>
    %c0_15 = arith.constant 0 : index
    %c0_16 = arith.constant 0 : index
    %40 = vector.load %arg4[%c0_15, %c0_16] : memref<256x128xbf16, #tpu.memory_space<vmem>>, vector<256x128xbf16>
    %cst_17 = arith.constant dense<0.000000e+00> : vector<128x128xf32>
    %41 = tpu.matmul %39, %40, %cst_17 {dimension_numbers = #tpu.dot_dimension_numbers<[1], [0], [0], [1], [0, 0, 1, 1], [], []>} : vector<128x256xbf16>, vector<256x128xbf16>, vector<128x128xf32> -> vector<128x128xf32>
    %42 = vector.extract_strided_slice %1 {offsets = [0, 0], sizes = [1, 128], strides = [1, 1]} : vector<3x128xf32> to vector<1x128xf32>
    %43 = vector.broadcast %42 : vector<1x128xf32> to vector<128x128xf32>
    %44 = arith.addf %41, %43 : vector<128x128xf32>
    %45 = vector.extract_strided_slice %1 {offsets = [1, 0], sizes = [1, 128], strides = [1, 1]} : vector<3x128xf32> to vector<1x128xf32>
    %46 = vector.extract_strided_slice %1 {offsets = [2, 0], sizes = [1, 128], strides = [1, 1]} : vector<3x128xf32> to vector<1x128xf32>
    %cst_18 = arith.constant dense<0.000000e+00> : vector<128xf32>
    %47 = vector.multi_reduction <add>, %44, %cst_18 [1] : vector<128x128xf32> to vector<128xf32>
    %48 = vector.shape_cast %47 : vector<128xf32> to vector<128x1xf32>
    %cst_19 = arith.constant 1.280000e+02 : f32
    %49 = vector.broadcast %cst_19 : f32 to vector<128x1xf32>
    %50 = arith.divf %48, %49 : vector<128x1xf32>
    %51 = vector.broadcast %50 : vector<128x1xf32> to vector<128x128xf32>
    %52 = arith.subf %44, %51 : vector<128x128xf32>
    %53 = arith.mulf %52, %52 : vector<128x128xf32>
    %cst_20 = arith.constant dense<0.000000e+00> : vector<128xf32>
    %54 = vector.multi_reduction <add>, %53, %cst_20 [1] : vector<128x128xf32> to vector<128xf32>
    %55 = vector.shape_cast %54 : vector<128xf32> to vector<128x1xf32>
    %cst_21 = arith.constant 1.280000e+02 : f32
    %56 = vector.broadcast %cst_21 : f32 to vector<128x1xf32>
    %57 = arith.divf %55, %56 : vector<128x1xf32>
    %cst_22 = arith.constant 9.99999974E-6 : f32
    %58 = vector.broadcast %cst_22 : f32 to vector<128x1xf32>
    %59 = arith.addf %57, %58 : vector<128x1xf32>
    %60 = math.rsqrt %59 : vector<128x1xf32>
    %61 = vector.broadcast %60 : vector<128x1xf32> to vector<128x128xf32>
    %62 = arith.mulf %52, %61 : vector<128x128xf32>
    %63 = vector.broadcast %45 : vector<1x128xf32> to vector<128x128xf32>
    %64 = arith.mulf %62, %63 : vector<128x128xf32>
    %65 = vector.broadcast %46 : vector<1x128xf32> to vector<128x128xf32>
    %66 = arith.addf %64, %65 : vector<128x128xf32>
    %c0_23 = arith.constant 0 : index
    %c0_24 = arith.constant 0 : index
    %67 = vector.load %arg1[%c0_23, %c0_24] : memref<128x128xf32, #tpu.memory_space<vmem>>, vector<128x128xf32>
    %68 = arith.addf %67, %66 : vector<128x128xf32>
    %c0_25 = arith.constant 0 : index
    %c0_26 = arith.constant 0 : index
    %69 = vector.load %arg6[%c0_25, %c0_26] : memref<128x128xf32, #tpu.memory_space<vmem>>, vector<128x128xf32>
    tpu.vector_store %arg6[%c0_25, %c0_26], %68 {strides = array<i32>} : memref<128x128xf32, #tpu.memory_space<vmem>>, vector<128x128xf32>,
    return
  }
  func.func @transform_0(%arg0: i32) -> (i32, i32) {
    %c0_i32 = arith.constant 0 : i32
    %c0_i32_0 = arith.constant 0 : i32
    return %arg0, %c0_i32 : i32, i32
  }
  func.func @transform_1(%arg0: i32) -> (i32, i32) {
    %c0_i32 = arith.constant 0 : i32
    %c0_i32_0 = arith.constant 0 : i32
    %c0_i32_1 = arith.constant 0 : i32
    return %c0_i32, %c0_i32_0 : i32, i32
  }
  func.func @transform_2(%arg0: i32) -> (i32, i32) {
    %c0_i32 = arith.constant 0 : i32
    %c0_i32_0 = arith.constant 0 : i32
    %c0_i32_1 = arith.constant 0 : i32
    return %c0_i32, %c0_i32_0 : i32, i32
  }
  func.func @transform_3(%arg0: i32) -> (i32, i32) {
    %c0_i32 = arith.constant 0 : i32
    %c0_i32_0 = arith.constant 0 : i32
    %c0_i32_1 = arith.constant 0 : i32
    return %c0_i32, %c0_i32_0 : i32, i32
  }
  func.func @transform_4(%arg0: i32) -> (i32, i32) {
    %c0_i32 = arith.constant 0 : i32
    %c0_i32_0 = arith.constant 0 : i32
    %c0_i32_1 = arith.constant 0 : i32
    return %c0_i32, %c0_i32_0 : i32, i32
  }
  func.func @transform_5(%arg0: i32) -> (i32, i32) {
    %c0_i32 = arith.constant 0 : i32
    %c0_i32_0 = arith.constant 0 : i32
    return %arg0, %c0_i32 : i32, i32
  }
}

</mosaic_0001>

<llo_original>
// kernel: residual_block.1
$region0: #{residual_block.1}
  #allocation0 [shape = 'u32[]', space=smem, size = 0x4, offset = 0x4, fixed_abs, tag = 'smem constant byte address 0x4 - core index']
  #allocation1 [shape = 'u32[144,128]{1,0:T(1,128)}', space=vmem, size = 0x12000, scoped, tag = 'internal scratch']
  %s0 = inlined_call_operand.hbm [shape: f32[512,128], index: 0, kind: input, shape index: {}]
  %s1 = inlined_call_operand.hbm [shape: bf16[128,256], index: 1, kind: input, shape index: {}]
  %s2 = inlined_call_operand.hbm [shape: f32[3,256], index: 2, kind: input, shape index: {}]
  %s3 = inlined_call_operand.hbm [shape: bf16[256,128], index: 3, kind: input, shape index: {}]
  %s4 = inlined_call_operand.vmem [shape: f32[3,128], index: 4, kind: input, shape index: {}]
  %s5 = inlined_call_operand.hbm [shape: f32[512,128], index: 5, kind: output, shape index: {}]
  %s6 = sld [smem:[#allocation0]]
  $region69: #{residual_block.1} parent=0
    _
  %s8 = ssub.s32 1, %s6
  %s9 = scalar_select 0, %s8, %s6
  $region1: #{residual_block.1} parent=0
    #allocation2 [shape = 'u8[131072]{0}', space=vmem, size = 0x20000, scoped, tag = 'input window, operand 0']
    #allocation3 [shape = 's32[2]{0}', space=sflag, size = 0x8, scoped, tag = 'scoped memory for residual_block.1']
    #allocation4 [shape = 's32[2]{0}', space=sflag, size = 0x8, scoped, tag = 'scoped memory for residual_block.1']
    #allocation5 [shape = 'u8[65536]{0}', space=vmem, size = 0x10000, scoped, tag = 'input window, operand 1, single buffered']
    #allocation6 [shape = 's32[1]{0}', space=sflag, size = 0x4, scoped, tag = 'scoped memory for residual_block.1']
    #allocation7 [shape = 'u8[4096]{0}', space=vmem, size = 0x1000, scoped, tag = 'input window, operand 2, single buffered']
    #allocation8 [shape = 'u8[65536]{0}', space=vmem, size = 0x10000, scoped, tag = 'input window, operand 3, single buffered']
    #allocation9 [shape = 's32[1]{0}', space=sflag, size = 0x4, scoped, tag = 'scoped memory for residual_block.1']
    #allocation10 [shape = 'u8[131072]{0}', space=vmem, size = 0x20000, scoped, tag = 'output window, operand 0']
    %10 = vsyncpa [#allocation3], 0
    %s11 = scalar_lea.sflag [#allocation3], 1
    %12 = vsyncpa %s11, 0
    %13 = vsyncpa [#allocation6], 0
    %14 = vsyncpa [#allocation9], 0
    %15 = vsyncpa [#allocation4], 0
    %s16 = scalar_lea.sflag [#allocation4], 1
    %17 = vsyncpa %s16, 0
    loop: start=0, step=1, limit=6
    $region2: #{residual_block.1} parent=1 // loop_pre_header
      _
    $region3: #{residual_block.1} parent=1 // loop_header
      %s19 = sphi 0, %s23
      %p20 = scmp.ge.s32.totalorder %s19, 6
      %s29 = sphi 0, %s31
      %s32 = sphi 0, %s29
      %s33 = sphi 0, %s32
      %s49 = sphi 0, %s33
      %s53 = sphi 0, %s53
      %s55 = sphi 0, %s53
      %s56 = sphi 0, %s55
      %s70 = sphi 0, %s56
      %s74 = sphi 0, %s74
      %s76 = sphi 0, %s74
      %s77 = sphi 0, %s76
      %s91 = sphi 0, %s77
      %s95 = sphi 0, %s95
      %s97 = sphi 0, %s95
      %s98 = sphi 0, %s97
      %s112 = sphi 0, %s98
      %s116 = sphi 0, %s116
      %s118 = sphi 0, %s116
      %s119 = sphi 0, %s118
      %s133 = sphi 0, %s119
      %s139 = sphi 0, %s141
      %s142 = sphi 0, %s139
      %s143 = sphi 0, %s142
      %s159 = sphi 0, %s143
    $region4: #{residual_block.1} parent=1 // loop_header_branch
      %22 = sbr.rel (%p20) target = $region8
    $region5: #{residual_block.1} parent=1 // loop_body
      %s24 = ssub.s32 %s19, 1
      %s25 = ssub.s32 %s19, 2
      %s26 = sadd.s32 %s19, 1
      %s27 = ssub.s32 %s19, %s26
      %p28 = scmp.eq.s32.totalorder %s27, 0
      %s30 = sadd.s32 %s29, 1
      %s31 = scalar_select %p28, %s29, %s30
      %p34 = pneg %p28
      %p35 = scmp.eq.s32.totalorder %s19, 3
      %p36 = por %p34, %p35
      %p37 = scmp.ne.s32.totalorder %s29, %s32
      %p38 = scmp.eq.s32.totalorder %s19, 0
      %p39 = por %p37, %p38
      %p40 = scmp.ne.s32.totalorder %s29, %s32
      %p41 = scmp.eq.s32.totalorder %s24, 3
      %p42 = por %p40, %p41
      %p43 = scmp.ne.s32.totalorder %s32, %s33
      %p44 = scmp.eq.s32.totalorder %s24, 0
      %p45 = por %p43, %p44
      %p46 = scmp.ne.s32.totalorder %s32, %s33
      %p47 = scmp.eq.s32.totalorder %s25, 3
      %p48 = por %p46, %p47
      %p50 = scmp.ne.s32.totalorder %s33, %s49
      %p51 = scmp.eq.s32.totalorder %s25, 0
      %p52 = por %p50, %p51
      %s54 = sadd.s32 %s53, 1
      %p57 = scmp.eq.s32.totalorder %s19, 3
      %p58 = scmp.ne.s32.totalorder %s53, %s55
      %p59 = scmp.eq.s32.totalorder %s19, 0
      %p60 = por %p58, %p59
      %p61 = scmp.ne.s32.totalorder %s53, %s55
      %p62 = scmp.eq.s32.totalorder %s24, 3
      %p63 = por %p61, %p62
      %p64 = scmp.ne.s32.totalorder %s55, %s56
      %p65 = scmp.eq.s32.totalorder %s24, 0
      %p66 = por %p64, %p65
      %p67 = scmp.ne.s32.totalorder %s55, %s56
      %p68 = scmp.eq.s32.totalorder %s25, 3
      %p69 = por %p67, %p68
      %p71 = scmp.ne.s32.totalorder %s56, %s70
      %p72 = scmp.eq.s32.totalorder %s25, 0
      %p73 = por %p71, %p72
      %s75 = sadd.s32 %s74, 1
      %p78 = scmp.eq.s32.totalorder %s19, 3
      %p79 = scmp.ne.s32.totalorder %s74, %s76
      %p80 = scmp.eq.s32.totalorder %s19, 0
      %p81 = por %p79, %p80
      %p82 = scmp.ne.s32.totalorder %s74, %s76
      %p83 = scmp.eq.s32.totalorder %s24, 3
      %p84 = por %p82, %p83
      %p85 = scmp.ne.s32.totalorder %s76, %s77
      %p86 = scmp.eq.s32.totalorder %s24, 0
      %p87 = por %p85, %p86
      %p88 = scmp.ne.s32.totalorder %s76, %s77
      %p89 = scmp.eq.s32.totalorder %s25, 3
      %p90 = por %p88, %p89
      %p92 = scmp.ne.s32.totalorder %s77, %s91
      %p93 = scmp.eq.s32.totalorder %s25, 0
      %p94 = por %p92, %p93
      %s96 = sadd.s32 %s95, 1
      %p99 = scmp.eq.s32.totalorder %s19, 3
      %p100 = scmp.ne.s32.totalorder %s95, %s97
      %p101 = scmp.eq.s32.totalorder %s19, 0
      %p102 = por %p100, %p101
      %p103 = scmp.ne.s32.totalorder %s95, %s97
      %p104 = scmp.eq.s32.totalorder %s24, 3
      %p105 = por %p103, %p104
      %p106 = scmp.ne.s32.totalorder %s97, %s98
      %p107 = scmp.eq.s32.totalorder %s24, 0
      %p108 = por %p106, %p107
      %p109 = scmp.ne.s32.totalorder %s97, %s98
      %p110 = scmp.eq.s32.totalorder %s25, 3
      %p111 = por %p109, %p110
      %p113 = scmp.ne.s32.totalorder %s98, %s112
      %p114 = scmp.eq.s32.totalorder %s25, 0
      %p115 = por %p113, %p114
      %s117 = sadd.s32 %s116, 1
      %p120 = scmp.eq.s32.totalorder %s19, 3
      %p121 = scmp.ne.s32.totalorder %s116, %s118
      %p122 = scmp.eq.s32.totalorder %s19, 0
      %p123 = por %p121, %p122
      %p124 = scmp.ne.s32.totalorder %s116, %s118
      %p125 = scmp.eq.s32.totalorder %s24, 3
      %p126 = por %p124, %p125
      %p127 = scmp.ne.s32.totalorder %s118, %s119
      %p128 = scmp.eq.s32.totalorder %s24, 0
      %p129 = por %p127, %p128
      %p130 = scmp.ne.s32.totalorder %s118, %s119
      %p131 = scmp.eq.s32.totalorder %s25, 3
      %p132 = por %p130, %p131
      %p134 = scmp.ne.s32.totalorder %s119, %s133
      %p135 = scmp.eq.s32.totalorder %s25, 0
      %p136 = por %p134, %p135
      %s137 = ssub.s32 %s19, %s26
      %p138 = scmp.eq.s32.totalorder %s137, 0
      %s140 = sadd.s32 %s139, 1
      %s141 = scalar_select %p138, %s139, %s140
      %p144 = pneg %p138
      %p145 = scmp.eq.s32.totalorder %s19, 3
      %p146 = por %p144, %p145
      %p147 = scmp.ne.s32.totalorder %s139, %s142
      %p148 = scmp.eq.s32.totalorder %s19, 0
      %p149 = por %p147, %p148
      %p150 = scmp.ne.s32.totalorder %s139, %s142
      %p151 = scmp.eq.s32.totalorder %s24, 3
      %p152 = por %p150, %p151
      %p153 = scmp.ne.s32.totalorder %s142, %s143
      %p154 = scmp.eq.s32.totalorder %s24, 0
      %p155 = por %p153, %p154
      %p156 = scmp.ne.s32.totalorder %s142, %s143
      %p157 = scmp.eq.s32.totalorder %s25, 3
      %p158 = por %p156, %p157
      %p160 = scmp.ne.s32.totalorder %s143, %s159
      %p161 = scmp.eq.s32.totalorder %s25, 0
      %p162 = por %p160, %p161
      %p163 = scmp.le.s32.totalorder 1, %s19
      %p164 = scmp.lt.s32.totalorder %s19, 5
      %p165 = pnand %p163, %p164
      %p166 = pneg %p165
      // Predicated region
      $region9: #{residual_block.1} parent=5 // pred_check
        _
      $region10: #{residual_block.1} parent=5 // pred_check_branch
        %168 = sbr.rel (%p165) target = $region12
      $region11: #{residual_block.1} parent=5 // pred_region
        %s169 = ssub.s32 %s19, 1
        // Predicated region
        $region13: #{residual_block.1} parent=11 // pred_check
          %p170 = pneg %p66
        $region14: #{residual_block.1} parent=11 // pred_check_branch
          %172 = sbr.rel (%p170) target = $region16
        $region15: #{residual_block.1} parent=11 // pred_region
          %s174 = ssub.s32 2048, 2048
          %175 = vsyncadd [#allocation6], %s174
          %s176 = sshll.u32 [#allocation5], 4
          %s177 = int_to_ptr.vmem [resolvable:$true] %s176
          %182 = dma.hbm_to_vmem [thread:$0]  %s1, 2048, %s177, [#allocation6], 128, 128, 8
        $region16: #{residual_block.1} parent=11 // pred_fallthru
          _
        // Predicated region
        $region17: #{residual_block.1} parent=11 // pred_check
          %p183 = pneg %p87
        $region18: #{residual_block.1} parent=11 // pred_check_branch
          %185 = sbr.rel (%p183) target = $region20
        $region19: #{residual_block.1} parent=11 // pred_region
          %s187 = ssub.s32 128, 128
          %188 = vsyncadd [#allocation6], %s187
          %s190 = sshll.u32 [#allocation7], 4
          %s191 = int_to_ptr.vmem [resolvable:$true] %s190
          %193 = dma.hbm_to_vmem [thread:$0]  %s2, 128, %s191, [#allocation6]
        $region20: #{residual_block.1} parent=11 // pred_fallthru
          _
        // Predicated region
        $region21: #{residual_block.1} parent=11 // pred_check
          %p194 = pneg %p108
        $region22: #{residual_block.1} parent=11 // pred_check_branch
          %196 = sbr.rel (%p194) target = $region24
        $region23: #{residual_block.1} parent=11 // pred_region
          %s198 = ssub.s32 2048, 2048
          %199 = vsyncadd [#allocation9], %s198
          %s200 = sshll.u32 [#allocation8], 4
          %s201 = int_to_ptr.vmem [resolvable:$true] %s200
          %206 = dma.hbm_to_vmem [thread:$0]  %s3, 2048, %s201, [#allocation9], 64, 64, 4
        $region24: #{residual_block.1} parent=11 // pred_fallthru
          _
        // Predicated region
        $region25: #{residual_block.1} parent=11 // pred_check
          %p207 = pneg %p129
        $region26: #{residual_block.1} parent=11 // pred_check_branch
          %209 = sbr.rel (%p207) target = $region28
        $region27: #{residual_block.1} parent=11 // pred_region
          _
        $region28: #{residual_block.1} parent=11 // pred_fallthru
          _
      $region12: #{residual_block.1} parent=5 // pred_fallthru
        _
      %p210 = scmp.lt.s32.totalorder %s19, 4
      // Predicated region
      $region29: #{residual_block.1} parent=5 // pred_check
        %p211 = pneg %p210
      $region30: #{residual_block.1} parent=5 // pred_check_branch
        %213 = sbr.rel (%p211) target = $region32
      $region31: #{residual_block.1} parent=5 // pred_region
        // Predicated region
        $region33: #{residual_block.1} parent=31 // pred_check
          %p214 = pneg %p39
        $region34: #{residual_block.1} parent=31 // pred_check_branch
          %216 = sbr.rel (%p214) target = $region36
        $region35: #{residual_block.1} parent=31 // pred_region
          %s217 = sand.u32 %s29, 1
          %s218 = scalar_lea.sflag [#allocation3], %s217
          %s219 = sand.u32 %s29, 1
          %s220 = smul.addr %s219, 128
          %s221 = scalar_lea.vmem [#allocation2], %s220
          %s222 = smul.u32 16, %s19
          %s224 = ssub.s32 2048, 2048
          %225 = vsyncadd %s218, %s224
          %s226 = smul.addr %s222, 128
          %s227 = scalar_lea.hbm %s0, %s226
          %s228 = sshll.u32 %s221, 4
          %s229 = int_to_ptr.vmem [resolvable:$true] %s228
          %234 = dma.hbm_to_vmem [thread:$0]  %s227, 2048, %s229, %s218, 128, 128, 8
        $region36: #{residual_block.1} parent=31 // pred_fallthru
          _
      $region32: #{residual_block.1} parent=5 // pred_fallthru
        _
      %p235 = scmp.le.s32.totalorder 1, %s19
      %p236 = scmp.lt.s32.totalorder %s19, 5
      %p237 = pnand %p235, %p236
      %p238 = pneg %p237
      // Predicated region
      $region37: #{residual_block.1} parent=5 // pred_check
        _
      $region38: #{residual_block.1} parent=5 // pred_check_branch
        %240 = sbr.rel (%p237) target = $region40
      $region39: #{residual_block.1} parent=5 // pred_region
        %s241 = ssub.s32 %s19, 1
        %s242 = sand.u32 %s32, 1
        %s243 = scalar_lea.sflag [#allocation3], %s242
        %s244 = sand.u32 %s32, 1
        %s245 = smul.addr %s244, 128
        %s246 = scalar_lea.vmem [#allocation2], %s245
        // Predicated region
        $region41: #{residual_block.1} parent=39 // pred_check
          %p247 = pneg %p45
        $region42: #{residual_block.1} parent=39 // pred_check_branch
          %249 = sbr.rel (%p247) target = $region44
        $region43: #{residual_block.1} parent=39 // pred_region
          %250 = dma.done %s243, 2048
        $region44: #{residual_block.1} parent=39 // pred_fallthru
          _
        // Predicated region
        $region45: #{residual_block.1} parent=39 // pred_check
          %p251 = pneg %p66
        $region46: #{residual_block.1} parent=39 // pred_check_branch
          %253 = sbr.rel (%p251) target = $region48
        $region47: #{residual_block.1} parent=39 // pred_region
          %254 = dma.done [#allocation6], 2048
        $region48: #{residual_block.1} parent=39 // pred_fallthru
          _
        // Predicated region
        $region49: #{residual_block.1} parent=39 // pred_check
          %p255 = pneg %p87
        $region50: #{residual_block.1} parent=39 // pred_check_branch
          %257 = sbr.rel (%p255) target = $region52
        $region51: #{residual_block.1} parent=39 // pred_region
          %258 = dma.done [#allocation6], 128
        $region52: #{residual_block.1} parent=39 // pred_fallthru
          _
        // Predicated region
        $region53: #{residual_block.1} parent=39 // pred_check
          %p259 = pneg %p108
        $region54: #{residual_block.1} parent=39 // pred_check_branch
          %261 = sbr.rel (%p259) target = $region56
        $region55: #{residual_block.1} parent=39 // pred_region
          %262 = dma.done [#allocation9], 2048
        $region56: #{residual_block.1} parent=39 // pred_fallthru
          _
        %s263 = sand.u32 %s32, 1
        %s264 = scalar_lea.sflag [#allocation3], %s263
        %s265 = sand.u32 %s32, 1
        %s266 = smul.addr %s265, 128
        %s267 = scalar_lea.vmem [#allocation2], %s266
        %p268 = pneg %p45
        %p269 = pneg %p42
        %p270 = pneg %p66
        %p271 = pneg %p63
        %p272 = pneg %p87
        %p273 = pneg %p84
        %p274 = pneg %p108
        %p275 = pneg %p105
        %p276 = pneg %p129
        %p277 = pneg %p126
        %p278 = pneg %p155
        %p279 = pneg %p152
        %s280 = sand.u32 %s142, 1
        %s281 = scalar_lea.sflag [#allocation4], %s280
        %s282 = sand.u32 %s142, 1
        %s283 = smul.addr %s282, 128
        %s284 = scalar_lea.vmem [#allocation10], %s283
        %s285 = smul.u32 16, %s24
        %s286 = smul.u32 16, %s24
        %v288 = vld [vmem:[#allocation7] sm:$0x77]
        %v289 = vld [vmem:[%s4] sm:$0x7]
        %v290 = vld [vmem:[%s246] sm:$0xff]
        %v291 = vld [vmem:[%s246 + $0x8] sm:$0xff]
        %v292 = vld [vmem:[%s246 + $0x10] sm:$0xff]
        %v293 = vld [vmem:[%s246 + $0x18] sm:$0xff]
        %v294 = vld [vmem:[%s246 + $0x20] sm:$0xff]
        %v295 = vld [vmem:[%s246 + $0x28] sm:$0xff]
        %v296 = vld [vmem:[%s246 + $0x30] sm:$0xff]
        %v297 = vld [vmem:[%s246 + $0x38] sm:$0xff]
        %v298 = vld [vmem:[%s246 + $0x40] sm:$0xff]
        %v299 = vld [vmem:[%s246 + $0x48] sm:$0xff]
        %v300 = vld [vmem:[%s246 + $0x50] sm:$0xff]
        %v301 = vld [vmem:[%s246 + $0x58] sm:$0xff]
        %v302 = vld [vmem:[%s246 + $0x60] sm:$0xff]
        %v303 = vld [vmem:[%s246 + $0x68] sm:$0xff]
        %v304 = vld [vmem:[%s246 + $0x70] sm:$0xff]
        %v305 = vld [vmem:[%s246 + $0x78] sm:$0xff]
        %v306 = vpack.c.bf16 %v291, %v290
        %v307 = vpack.c.bf16 %v293, %v292
        %v308 = vpack.c.bf16 %v295, %v294
        %v309 = vpack.c.bf16 %v297, %v296
        %v310 = vpack.c.bf16 %v299, %v298
        %v311 = vpack.c.bf16 %v301, %v300
        %v312 = vpack.c.bf16 %v303, %v302
        %v313 = vpack.c.bf16 %v305, %v304
        %v314 = vld [vmem:[#allocation5] sm:$0xff]
        %v315 = vld [vmem:[#allocation5 + $0x8] sm:$0xff]
        %v316 = vld [vmem:[#allocation5 + $0x10] sm:$0xff]
        %v317 = vld [vmem:[#allocation5 + $0x18] sm:$0xff]
        %v318 = vld [vmem:[#allocation5 + $0x20] sm:$0xff]
        %v319 = vld [vmem:[#allocation5 + $0x28] sm:$0xff]
        %v320 = vld [vmem:[#allocation5 + $0x30] sm:$0xff]
        %v321 = vld [vmem:[#allocation5 + $0x38] sm:$0xff]
        %v322 = vld [vmem:[#allocation5 + $0x40] sm:$0xff]
        %v323 = vld [vmem:[#allocation5 + $0x48] sm:$0xff]
        %v324 = vld [vmem:[#allocation5 + $0x50] sm:$0xff]
        %v325 = vld [vmem:[#allocation5 + $0x58] sm:$0xff]
        %v326 = vld [vmem:[#allocation5 + $0x60] sm:$0xff]
        %v327 = vld [vmem:[#allocation5 + $0x68] sm:$0xff]
        %v328 = vld [vmem:[#allocation5 + $0x70] sm:$0xff]
        %v329 = vld [vmem:[#allocation5 + $0x78] sm:$0xff]
        %v331 = vlaneseq
        %v332 = vshrl.u32 %v331, 7
        %v333 = vsub.s32 0, %v332
        %v334 = vrot.slane %v288, %v333
        %v335 = vlaneseq
        %v336 = vshrl.u32 %v335, 7
        %v337 = vsub.s32 4, %v336
        %v338 = vrot.slane %v288, %v337
        %v341 = vlaneseq
        %v342 = vshrl.u32 %v341, 7
        %v343 = vsub.s32 0, %v342
        %v344 = vrot.slane %v334, %v343
        %v345 = vlaneseq
        %v346 = vshrl.u32 %v345, 7
        %v347 = vsub.s32 0, %v346
        %v348 = vrot.slane %v338, %v347
        %v365 = vunpack.c.l.b16 %v314
        %v366 = vunpack.c.h.b16 %v314
        %v367 = vunpack.c.l.b16 %v315
        %v368 = vunpack.c.h.b16 %v315
        %v369 = vunpack.c.l.b16 %v316
        %v370 = vunpack.c.h.b16 %v316
        %v371 = vunpack.c.l.b16 %v317
        %v372 = vunpack.c.h.b16 %v317
        %v373 = vunpack.c.l.b16 %v318
        %v374 = vunpack.c.h.b16 %v318
        %v375 = vunpack.c.l.b16 %v319
        %v376 = vunpack.c.h.b16 %v319
        %v377 = vunpack.c.l.b16 %v320
        %v378 = vunpack.c.h.b16 %v320
        %v379 = vunpack.c.l.b16 %v321
        %v380 = vunpack.c.h.b16 %v321
        %v381 = vunpack.c.l.b16 %v322
        %v382 = vunpack.c.h.b16 %v322
        %v383 = vunpack.c.l.b16 %v323
        %v384 = vunpack.c.h.b16 %v323
        %v385 = vunpack.c.l.b16 %v324
        %v386 = vunpack.c.h.b16 %v324
        %v387 = vunpack.c.l.b16 %v325
        %v388 = vunpack.c.h.b16 %v325
        %v389 = vunpack.c.l.b16 %v326
        %v390 = vunpack.c.h.b16 %v326
        %v391 = vunpack.c.l.b16 %v327
        %v392 = vunpack.c.h.b16 %v327
        %v393 = vunpack.c.l.b16 %v328
        %v394 = vunpack.c.h.b16 %v328
        %v395 = vunpack.c.l.b16 %v329
        %v396 = vunpack.c.h.b16 %v329
        %v397 = vpack.c.b16 %v367, %v365
        %v398 = vpack.c.b16 %v368, %v366
        %v399 = vpack.c.b16 %v371, %v369
        %v400 = vpack.c.b16 %v372, %v370
        %v401 = vpack.c.b16 %v375, %v373
        %v402 = vpack.c.b16 %v376, %v374
        %v403 = vpack.c.b16 %v379, %v377
        %v404 = vpack.c.b16 %v380, %v378
        %v405 = vpack.c.b16 %v383, %v381
        %v406 = vpack.c.b16 %v384, %v382
        %v407 = vpack.c.b16 %v387, %v385
        %v408 = vpack.c.b16 %v388, %v386
        %v409 = vpack.c.b16 %v391, %v389
        %v410 = vpack.c.b16 %v392, %v390
        %v411 = vpack.c.b16 %v395, %v393
        %v412 = vpack.c.b16 %v396, %v394
        %429 = vmatprep.subr.bf16.mxu0 %v412
        %430 = vmatpush1.bf16.msra.mxu0 %v411
        %431 = vmatprep.subr.bf16.mxu0 %v410
        %432 = vmatpush1.bf16.msra.mxu0 %v409
        %433 = vmatprep.subr.bf16.mxu0 %v408
        %434 = vmatpush1.bf16.msra.mxu0 %v407
        %435 = vmatprep.subr.bf16.mxu0 %v406
        %436 = vmatpush1.bf16.msra.mxu0 %v405
        %437 = vmatprep.subr.bf16.mxu0 %v404
        %438 = vmatpush1.bf16.msra.mxu0 %v403
        %439 = vmatprep.subr.bf16.mxu0 %v402
        %440 = vmatpush1.bf16.msra.mxu0 %v401
        %441 = vmatprep.subr.bf16.mxu0 %v400
        %442 = vmatpush1.bf16.msra.mxu0 %v399
        %443 = vmatprep.subr.bf16.mxu0 %v398
        %444 = vmatpush1.bf16.msra.mxu0 %v397
        %445 = vmatprep.subr.bf16.mxu0 0
        %446 = vmatpush2.bf16.msra.mxu0 0
        %447 = vmatprep.subr.bf16.mxu0 0
        %448 = vmatpush2.bf16.msra.mxu0 0
        %449 = vmatprep.subr.bf16.mxu0 0
        %450 = vmatpush2.bf16.msra.mxu0 0
        %451 = vmatprep.subr.bf16.mxu0 0
        %452 = vmatpush2.bf16.msra.mxu0 0
        %453 = vmatprep.subr.bf16.mxu0 0
        %454 = vmatpush2.bf16.msra.mxu0 0
        %455 = vmatprep.subr.bf16.mxu0 0
        %456 = vmatpush2.bf16.msra.mxu0 0
        %457 = vmatprep.subr.bf16.mxu0 0
        %458 = vmatpush2.bf16.msra.mxu0 0
        %459 = vmatprep.subr.bf16.mxu0 0
        %460 = vmatpush2.bf16.msra.mxu0 0
        %461 = vmatprep.mubr.bf16.mxu0 0
        %462 = vmatmul.mubr.bf16.gmra.mxu0 %v306
        %v463 = vpop.f32.mrf.mxu0
        %v464 = vadd.f32 %v344, %v463
        %v465 = vpop.f32.mrf.mxu0
        %v466 = vadd.f32 %v348, %v465
        %v467 = vpop.f32.mrf.mxu0
        %v468 = vadd.f32 %v344, %v467
        %v469 = vpop.f32.mrf.mxu0
        %v470 = vadd.f32 %v348, %v469
        %471 = vmatprep.mubr.bf16.mxu0 0
        %472 = vmatmul.mubr.bf16.gmra.mxu0 %v307
        %v473 = vpop.f32.mrf.mxu0
        %v474 = vadd.f32 %v344, %v473
        %v475 = vpop.f32.mrf.mxu0
        %v476 = vadd.f32 %v348, %v475
        %v477 = vpop.f32.mrf.mxu0
        %v478 = vadd.f32 %v344, %v477
        %v479 = vpop.f32.mrf.mxu0
        %v480 = vadd.f32 %v348, %v479
        %481 = vmatprep.mubr.bf16.mxu0 0
        %482 = vmatmul.mubr.bf16.gmra.mxu0 %v308
        %v483 = vpop.f32.mrf.mxu0
        %v484 = vadd.f32 %v344, %v483
        %v485 = vpop.f32.mrf.mxu0
        %v486 = vadd.f32 %v348, %v485
        %v487 = vpop.f32.mrf.mxu0
        %v488 = vadd.f32 %v344, %v487
        %v489 = vpop.f32.mrf.mxu0
        %v490 = vadd.f32 %v348, %v489
        %491 = vmatprep.mubr.bf16.mxu0 0
        %492 = vmatmul.mubr.bf16.gmra.mxu0 %v309
        %v493 = vpop.f32.mrf.mxu0
        %v494 = vadd.f32 %v344, %v493
        %v495 = vpop.f32.mrf.mxu0
        %v496 = vadd.f32 %v348, %v495
        %v497 = vpop.f32.mrf.mxu0
        %v498 = vadd.f32 %v344, %v497
        %v499 = vpop.f32.mrf.mxu0
        %v500 = vadd.f32 %v348, %v499
        %501 = vmatprep.mubr.bf16.mxu0 0
        %502 = vmatmul.mubr.bf16.gmra.mxu0 %v310
        %v503 = vpop.f32.mrf.mxu0
        %v504 = vadd.f32 %v344, %v503
        %v505 = vpop.f32.mrf.mxu0
        %v506 = vadd.f32 %v348, %v505
        %v507 = vpop.f32.mrf.mxu0
        %v508 = vadd.f32 %v344, %v507
        %v509 = vpop.f32.mrf.mxu0
        %v510 = vadd.f32 %v348, %v509
        %511 = vmatprep.mubr.bf16.mxu0 0
        %512 = vmatmul.mubr.bf16.gmra.mxu0 %v311
        %v513 = vpop.f32.mrf.mxu0
        %v514 = vadd.f32 %v344, %v513
        %v515 = vpop.f32.mrf.mxu0
        %v516 = vadd.f32 %v348, %v515
        %v517 = vpop.f32.mrf.mxu0
        %v518 = vadd.f32 %v344, %v517
        %v519 = vpop.f32.mrf.mxu0
        %v520 = vadd.f32 %v348, %v519
        %521 = vmatprep.mubr.bf16.mxu0 0
        %522 = vmatmul.mubr.bf16.gmra.mxu0 %v312
        %v523 = vpop.f32.mrf.mxu0
        %v524 = vadd.f32 %v344, %v523
        %v525 = vpop.f32.mrf.mxu0
        %v526 = vadd.f32 %v348, %v525
        %v527 = vpop.f32.mrf.mxu0
        %v528 = vadd.f32 %v344, %v527
        %v529 = vpop.f32.mrf.mxu0
        %v530 = vadd.f32 %v348, %v529
        %531 = vmatprep.mubr.bf16.mxu0 0
        %532 = vmatmul.mubr.bf16.gmra.mxu0 %v313
        %v533 = vpop.f32.mrf.mxu0
        %v534 = vadd.f32 %v344, %v533
        %v535 = vpop.f32.mrf.mxu0
        %v536 = vadd.f32 %v348, %v535
        %v537 = vpop.f32.mrf.mxu0
        %v538 = vadd.f32 %v344, %v537
        %v539 = vpop.f32.mrf.mxu0
        %v540 = vadd.f32 %v348, %v539
        %541 = vdwg.mxu0
        %v542 = vadd.f32 %v464, %v466
        %543 = vadd.xlane.f32.xlu0 %v542
        %v544 = vpop.xlane.xlu0 %543
        %v545 = vadd.f32 %v468, %v470
        %546 = vadd.xlane.f32.xlu0 %v545
        %v547 = vpop.xlane.xlu0 %546
        %v548 = vadd.f32 %v474, %v476
        %549 = vadd.xlane.f32.xlu0 %v548
        %v550 = vpop.xlane.xlu0 %549
        %v551 = vadd.f32 %v478, %v480
        %552 = vadd.xlane.f32.xlu0 %v551
        %v553 = vpop.xlane.xlu0 %552
        %v554 = vadd.f32 %v484, %v486
        %555 = vadd.xlane.f32.xlu0 %v554
        %v556 = vpop.xlane.xlu0 %555
        %v557 = vadd.f32 %v488, %v490
        %558 = vadd.xlane.f32.xlu0 %v557
        %v559 = vpop.xlane.xlu0 %558
        %v560 = vadd.f32 %v494, %v496
        %561 = vadd.xlane.f32.xlu0 %v560
        %v562 = vpop.xlane.xlu0 %561
        %v563 = vadd.f32 %v498, %v500
        %564 = vadd.xlane.f32.xlu0 %v563
        %v565 = vpop.xlane.xlu0 %564
        %v566 = vadd.f32 %v504, %v506
        %567 = vadd.xlane.f32.xlu0 %v566
        %v568 = vpop.xlane.xlu0 %567
        %v569 = vadd.f32 %v508, %v510
        %570 = vadd.xlane.f32.xlu0 %v569
        %v571 = vpop.xlane.xlu0 %570
        %v572 = vadd.f32 %v514, %v516
        %573 = vadd.xlane.f32.xlu0 %v572
        %v574 = vpop.xlane.xlu0 %573
        %v575 = vadd.f32 %v518, %v520
        %576 = vadd.xlane.f32.xlu0 %v575
        %v577 = vpop.xlane.xlu0 %576
        %v578 = vadd.f32 %v524, %v526
        %579 = vadd.xlane.f32.xlu0 %v578
        %v580 = vpop.xlane.xlu0 %579
        %v581 = vadd.f32 %v528, %v530
        %582 = vadd.xlane.f32.xlu0 %v581
        %v583 = vpop.xlane.xlu0 %582
        %v584 = vadd.f32 %v534, %v536
        %585 = vadd.xlane.f32.xlu0 %v584
        %v586 = vpop.xlane.xlu0 %585
        %v587 = vadd.f32 %v538, %v540
        %588 = vadd.xlane.f32.xlu0 %v587
        %v589 = vpop.xlane.xlu0 %588
        %v590 = vrcp.pop 256.0
        %v591 = vmul.f32 %v544, %v590
        %v592 = vmul.f32 %v547, %v590
        %v593 = vmul.f32 %v550, %v590
        %v594 = vmul.f32 %v553, %v590
        %v595 = vmul.f32 %v556, %v590
        %v596 = vmul.f32 %v559, %v590
        %v597 = vmul.f32 %v562, %v590
        %v598 = vmul.f32 %v565, %v590
        %v599 = vmul.f32 %v568, %v590
        %v600 = vmul.f32 %v571, %v590
        %v601 = vmul.f32 %v574, %v590
        %v602 = vmul.f32 %v577, %v590
        %v603 = vmul.f32 %v580, %v590
        %v604 = vmul.f32 %v583, %v590
        %v605 = vmul.f32 %v586, %v590
        %v606 = vmul.f32 %v589, %v590
        %v607 = vsub.f32 %v464, %v591
        %v608 = vsub.f32 %v466, %v591
        %v609 = vsub.f32 %v468, %v592
        %v610 = vsub.f32 %v470, %v592
        %v611 = vsub.f32 %v474, %v593
        %v612 = vsub.f32 %v476, %v593
        %v613 = vsub.f32 %v478, %v594
        %v614 = vsub.f32 %v480, %v594
        %v615 = vsub.f32 %v484, %v595
        %v616 = vsub.f32 %v486, %v595
        %v617 = vsub.f32 %v488, %v596
        %v618 = vsub.f32 %v490, %v596
        %v619 = vsub.f32 %v494, %v597
        %v620 = vsub.f32 %v496, %v597
        %v621 = vsub.f32 %v498, %v598
        %v622 = vsub.f32 %v500, %v598
        %v623 = vsub.f32 %v504, %v599
        %v624 = vsub.f32 %v506, %v599
        %v625 = vsub.f32 %v508, %v600
        %v626 = vsub.f32 %v510, %v600
        %v627 = vsub.f32 %v514, %v601
        %v628 = vsub.f32 %v516, %v601
        %v629 = vsub.f32 %v518, %v602
        %v630 = vsub.f32 %v520, %v602
        %v631 = vsub.f32 %v524, %v603
        %v632 = vsub.f32 %v526, %v603
        %v633 = vsub.f32 %v528, %v604
        %v634 = vsub.f32 %v530, %v604
        %v635 = vsub.f32 %v534, %v605
        %v636 = vsub.f32 %v536, %v605
        %v637 = vsub.f32 %v538, %v606
        %v638 = vsub.f32 %v540, %v606
        %v639 = vmul.f32 %v607, %v607
        %v640 = vmul.f32 %v608, %v608
        %v641 = vmul.f32 %v609, %v609
        %v642 = vmul.f32 %v610, %v610
        %v643 = vmul.f32 %v611, %v611
        %v644 = vmul.f32 %v612, %v612
        %v645 = vmul.f32 %v613, %v613
        %v646 = vmul.f32 %v614, %v614
        %v647 = vmul.f32 %v615, %v615
        %v648 = vmul.f32 %v616, %v616
        %v649 = vmul.f32 %v617, %v617
        %v650 = vmul.f32 %v618, %v618
        %v651 = vmul.f32 %v619, %v619
        %v652 = vmul.f32 %v620, %v620
        %v653 = vmul.f32 %v621, %v621
        %v654 = vmul.f32 %v622, %v622
        %v655 = vmul.f32 %v623, %v623
        %v656 = vmul.f32 %v624, %v624
        %v657 = vmul.f32 %v625, %v625
        %v658 = vmul.f32 %v626, %v626
        %v659 = vmul.f32 %v627, %v627
        %v660 = vmul.f32 %v628, %v628
        %v661 = vmul.f32 %v629, %v629
        %v662 = vmul.f32 %v630, %v630
        %v663 = vmul.f32 %v631, %v631
        %v664 = vmul.f32 %v632, %v632
        %v665 = vmul.f32 %v633, %v633
        %v666 = vmul.f32 %v634, %v634
        %v667 = vmul.f32 %v635, %v635
        %v668 = vmul.f32 %v636, %v636
        %v669 = vmul.f32 %v637, %v637
        %v670 = vmul.f32 %v638, %v638
        %v671 = vadd.f32 %v639, %v640
        %672 = vadd.xlane.f32.xlu0 %v671
        %v673 = vpop.xlane.xlu0 %672
        %v674 = vadd.f32 %v641, %v642
        %675 = vadd.xlane.f32.xlu0 %v674
        %v676 = vpop.xlane.xlu0 %675
        %v677 = vadd.f32 %v643, %v644
        %678 = vadd.xlane.f32.xlu0 %v677
        %v679 = vpop.xlane.xlu0 %678
        %v680 = vadd.f32 %v645, %v646
        %681 = vadd.xlane.f32.xlu0 %v680
        %v682 = vpop.xlane.xlu0 %681
        %v683 = vadd.f32 %v647, %v648
        %684 = vadd.xlane.f32.xlu0 %v683
        %v685 = vpop.xlane.xlu0 %684
        %v686 = vadd.f32 %v649, %v650
        %687 = vadd.xlane.f32.xlu0 %v686
        %v688 = vpop.xlane.xlu0 %687
        %v689 = vadd.f32 %v651, %v652
        %690 = vadd.xlane.f32.xlu0 %v689
        %v691 = vpop.xlane.xlu0 %690
        %v692 = vadd.f32 %v653, %v654
        %693 = vadd.xlane.f32.xlu0 %v692
        %v694 = vpop.xlane.xlu0 %693
        %v695 = vadd.f32 %v655, %v656
        %696 = vadd.xlane.f32.xlu0 %v695
        %v697 = vpop.xlane.xlu0 %696
        %v698 = vadd.f32 %v657, %v658
        %699 = vadd.xlane.f32.xlu0 %v698
        %v700 = vpop.xlane.xlu0 %699
        %v701 = vadd.f32 %v659, %v660
        %702 = vadd.xlane.f32.xlu0 %v701
        %v703 = vpop.xlane.xlu0 %702
        %v704 = vadd.f32 %v661, %v662
        %705 = vadd.xlane.f32.xlu0 %v704
        %v706 = vpop.xlane.xlu0 %705
        %v707 = vadd.f32 %v663, %v664
        %708 = vadd.xlane.f32.xlu0 %v707
        %v709 = vpop.xlane.xlu0 %708
        %v710 = vadd.f32 %v665, %v666
        %711 = vadd.xlane.f32.xlu0 %v710
        %v712 = vpop.xlane.xlu0 %711
        %v713 = vadd.f32 %v667, %v668
        %714 = vadd.xlane.f32.xlu0 %v713
        %v715 = vpop.xlane.xlu0 %714
        %v716 = vadd.f32 %v669, %v670
        %717 = vadd.xlane.f32.xlu0 %v716
        %v718 = vpop.xlane.xlu0 %717
        %v719 = vmul.f32 %v673, %v590
        %v720 = vmul.f32 %v676, %v590
        %v721 = vmul.f32 %v679, %v590
        %v722 = vmul.f32 %v682, %v590
        %v723 = vmul.f32 %v685, %v590
        %v724 = vmul.f32 %v688, %v590
        %v725 = vmul.f32 %v691, %v590
        %v726 = vmul.f32 %v694, %v590
        %v727 = vmul.f32 %v697, %v590
        %v728 = vmul.f32 %v700, %v590
        %v729 = vmul.f32 %v703, %v590
        %v730 = vmul.f32 %v706, %v590
        %v731 = vmul.f32 %v709, %v590
        %v732 = vmul.f32 %v712, %v590
        %v733 = vmul.f32 %v715, %v590
        %v734 = vmul.f32 %v718, %v590
        %v735 = vadd.f32 %v719, 1e-05
        %v736 = vadd.f32 %v720, 1e-05
        %v737 = vadd.f32 %v721, 1e-05
        %v738 = vadd.f32 %v722, 1e-05
        %v739 = vadd.f32 %v723, 1e-05
        %v740 = vadd.f32 %v724, 1e-05
        %v741 = vadd.f32 %v725, 1e-05
        %v742 = vadd.f32 %v726, 1e-05
        %v743 = vadd.f32 %v727, 1e-05
        %v744 = vadd.f32 %v728, 1e-05
        %v745 = vadd.f32 %v729, 1e-05
        %v746 = vadd.f32 %v730, 1e-05
        %v747 = vadd.f32 %v731, 1e-05
        %v748 = vadd.f32 %v732, 1e-05
        %v749 = vadd.f32 %v733, 1e-05
        %v750 = vadd.f32 %v734, 1e-05
        %v751 = vrsqrt.pop %v735
        %v752 = vrsqrt.pop %v736
        %v753 = vrsqrt.pop %v737
        %v754 = vrsqrt.pop %v738
        %v755 = vrsqrt.pop %v739
        %v756 = vrsqrt.pop %v740
        %v757 = vrsqrt.pop %v741
        %v758 = vrsqrt.pop %v742
        %v759 = vrsqrt.pop %v743
        %v760 = vrsqrt.pop %v744
        %v761 = vrsqrt.pop %v745
        %v762 = vrsqrt.pop %v746
        %v763 = vrsqrt.pop %v747
        %v764 = vrsqrt.pop %v748
        %v765 = vrsqrt.pop %v749
        %v766 = vrsqrt.pop %v750
        %v767 = vmul.f32 %v607, %v751
        %v768 = vmul.f32 %v608, %v751
        %v769 = vmul.f32 %v609, %v752
        %v770 = vmul.f32 %v610, %v752
        %v771 = vmul.f32 %v611, %v753
        %v772 = vmul.f32 %v612, %v753
        %v773 = vmul.f32 %v613, %v754
        %v774 = vmul.f32 %v614, %v754
        %v775 = vmul.f32 %v615, %v755
        %v776 = vmul.f32 %v616, %v755
        %v777 = vmul.f32 %v617, %v756
        %v778 = vmul.f32 %v618, %v756
        %v779 = vmul.f32 %v619, %v757
        %v780 = vmul.f32 %v620, %v757
        %v781 = vmul.f32 %v621, %v758
        %v782 = vmul.f32 %v622, %v758
        %v783 = vmul.f32 %v623, %v759
        %v784 = vmul.f32 %v624, %v759
        %v785 = vmul.f32 %v625, %v760
        %v786 = vmul.f32 %v626, %v760
        %v787 = vmul.f32 %v627, %v761
        %v788 = vmul.f32 %v628, %v761
        %v789 = vmul.f32 %v629, %v762
        %v790 = vmul.f32 %v630, %v762
        %v791 = vmul.f32 %v631, %v763
        %v792 = vmul.f32 %v632, %v763
        %v793 = vmul.f32 %v633, %v764
        %v794 = vmul.f32 %v634, %v764
        %v795 = vmul.f32 %v635, %v765
        %v796 = vmul.f32 %v636, %v765
        %v797 = vmul.f32 %v637, %v766
        %v798 = vmul.f32 %v638, %v766
        %v799 = vlaneseq
        %v800 = vshrl.u32 %v799, 7
        %v801 = vsub.s32 1, %v800
        %v802 = vrot.slane %v288, %v801
        %v803 = vlaneseq
        %v804 = vshrl.u32 %v803, 7
        %v805 = vsub.s32 5, %v804
        %v806 = vrot.slane %v288, %v805
        %v809 = vlaneseq
        %v810 = vshrl.u32 %v809, 7
        %v811 = vsub.s32 1, %v810
        %v812 = vrot.slane %v802, %v811
        %v813 = vlaneseq
        %v814 = vshrl.u32 %v813, 7
        %v815 = vsub.s32 1, %v814
        %v816 = vrot.slane %v806, %v815
        %v817 = vmul.f32 %v767, %v812
        %v818 = vmul.f32 %v768, %v816
        %v819 = vmul.f32 %v769, %v812
        %v820 = vmul.f32 %v770, %v816
        %v821 = vmul.f32 %v771, %v812
        %v822 = vmul.f32 %v772, %v816
        %v823 = vmul.f32 %v773, %v812
        %v824 = vmul.f32 %v774, %v816
        %v825 = vmul.f32 %v775, %v812
        %v826 = vmul.f32 %v776, %v816
        %v827 = vmul.f32 %v777, %v812
        %v828 = vmul.f32 %v778, %v816
        %v829 = vmul.f32 %v779, %v812
        %v830 = vmul.f32 %v780, %v816
        %v831 = vmul.f32 %v781, %v812
        %v832 = vmul.f32 %v782, %v816
        %v833 = vmul.f32 %v783, %v812
        %v834 = vmul.f32 %v784, %v816
        %v835 = vmul.f32 %v785, %v812
        %v836 = vmul.f32 %v786, %v816
        %v837 = vmul.f32 %v787, %v812
        %v838 = vmul.f32 %v788, %v816
        %v839 = vmul.f32 %v789, %v812
        %v840 = vmul.f32 %v790, %v816
        %v841 = vmul.f32 %v791, %v812
        %v842 = vmul.f32 %v792, %v816
        %v843 = vmul.f32 %v793, %v812
        %v844 = vmul.f32 %v794, %v816
        %v845 = vmul.f32 %v795, %v812
        %v846 = vmul.f32 %v796, %v816
        %v847 = vmul.f32 %v797, %v812
        %v848 = vmul.f32 %v798, %v816
        %v849 = vlaneseq
        %v850 = vshrl.u32 %v849, 7
        %v851 = vsub.s32 2, %v850
        %v852 = vrot.slane %v288, %v851
        %v853 = vlaneseq
        %v854 = vshrl.u32 %v853, 7
        %v855 = vsub.s32 6, %v854
        %v856 = vrot.slane %v288, %v855
        %v859 = vlaneseq
        %v860 = vshrl.u32 %v859, 7
        %v861 = vsub.s32 2, %v860
        %v862 = vrot.slane %v852, %v861
        %v863 = vlaneseq
        %v864 = vshrl.u32 %v863, 7
        %v865 = vsub.s32 2, %v864
        %v866 = vrot.slane %v856, %v865
        %v867 = vadd.f32 %v817, %v862
        %v868 = vadd.f32 %v818, %v866
        %v869 = vadd.f32 %v819, %v862
        %v870 = vadd.f32 %v820, %v866
        %v871 = vadd.f32 %v821, %v862
        %v872 = vadd.f32 %v822, %v866
        %v873 = vadd.f32 %v823, %v862
        %v874 = vadd.f32 %v824, %v866
        %v875 = vadd.f32 %v825, %v862
        %v876 = vadd.f32 %v826, %v866
        %v877 = vadd.f32 %v827, %v862
        %v878 = vadd.f32 %v828, %v866
        %v879 = vadd.f32 %v829, %v862
        %v880 = vadd.f32 %v830, %v866
        %v881 = vadd.f32 %v831, %v862
        %v882 = vadd.f32 %v832, %v866
        %v883 = vadd.f32 %v833, %v862
        %v884 = vadd.f32 %v834, %v866
        %v885 = vadd.f32 %v835, %v862
        %v886 = vadd.f32 %v836, %v866
        %v887 = vadd.f32 %v837, %v862
        %v888 = vadd.f32 %v838, %v866
        %v889 = vadd.f32 %v839, %v862
        %v890 = vadd.f32 %v840, %v866
        %v891 = vadd.f32 %v841, %v862
        %v892 = vadd.f32 %v842, %v866
        %v893 = vadd.f32 %v843, %v862
        %v894 = vadd.f32 %v844, %v866
        %v895 = vadd.f32 %v845, %v862
        %v896 = vadd.f32 %v846, %v866
        %v897 = vadd.f32 %v847, %v862
        %v898 = vadd.f32 %v848, %v866
        %v899 = vmul.f32 %v867, 0.5
        %v900 = vmul.f32 %v868, 0.5
        %v901 = vmul.f32 %v869, 0.5
        %v902 = vmul.f32 %v870, 0.5
        %v903 = vmul.f32 %v871, 0.5
        %v904 = vmul.f32 %v872, 0.5
        %v905 = vmul.f32 %v873, 0.5
        %v906 = vmul.f32 %v874, 0.5
        %v907 = vmul.f32 %v875, 0.5
        %v908 = vmul.f32 %v876, 0.5
        %v909 = vmul.f32 %v877, 0.5
        %v910 = vmul.f32 %v878, 0.5
        %v911 = vmul.f32 %v879, 0.5
        %v912 = vmul.f32 %v880, 0.5
        %v913 = vmul.f32 %v881, 0.5
        %v914 = vmul.f32 %v882, 0.5
        %v915 = vmul.f32 %v883, 0.5
        %v916 = vmul.f32 %v884, 0.5
        %v917 = vmul.f32 %v885, 0.5
        %v918 = vmul.f32 %v886, 0.5
        %v919 = vmul.f32 %v887, 0.5
        %v920 = vmul.f32 %v888, 0.5
        %v921 = vmul.f32 %v889, 0.5
        %v922 = vmul.f32 %v890, 0.5
        %v923 = vmul.f32 %v891, 0.5
        %v924 = vmul.f32 %v892, 0.5
        %v925 = vmul.f32 %v893, 0.5
        %v926 = vmul.f32 %v894, 0.5
        %v927 = vmul.f32 %v895, 0.5
        %v928 = vmul.f32 %v896, 0.5
        %v929 = vmul.f32 %v897, 0.5
        %v930 = vmul.f32 %v898, 0.5
        %v931 = vmul.f32 %v867, 0.70710677
        %v932 = vmul.f32 %v868, 0.70710677
        %v933 = vmul.f32 %v869, 0.70710677
        %v934 = vmul.f32 %v870, 0.70710677
        %v935 = vmul.f32 %v871, 0.70710677
        %v936 = vmul.f32 %v872, 0.70710677
        %v937 = vmul.f32 %v873, 0.70710677
        %v938 = vmul.f32 %v874, 0.70710677
        %v939 = vmul.f32 %v875, 0.70710677
        %v940 = vmul.f32 %v876, 0.70710677
        %v941 = vmul.f32 %v877, 0.70710677
        %v942 = vmul.f32 %v878, 0.70710677
        %v943 = vmul.f32 %v879, 0.70710677
        %v944 = vmul.f32 %v880, 0.70710677
        %v945 = vmul.f32 %v881, 0.70710677
        %v946 = vmul.f32 %v882, 0.70710677
        %v947 = vmul.f32 %v883, 0.70710677
        %v948 = vmul.f32 %v884, 0.70710677
        %v949 = vmul.f32 %v885, 0.70710677
        %v950 = vmul.f32 %v886, 0.70710677
        %v951 = vmul.f32 %v887, 0.70710677
        %v952 = vmul.f32 %v888, 0.70710677
        %v953 = vmul.f32 %v889, 0.70710677
        %v954 = vmul.f32 %v890, 0.70710677
        %v955 = vmul.f32 %v891, 0.70710677
        %v956 = vmul.f32 %v892, 0.70710677
        %v957 = vmul.f32 %v893, 0.70710677
        %v958 = vmul.f32 %v894, 0.70710677
        %v959 = vmul.f32 %v895, 0.70710677
        %v960 = vmul.f32 %v896, 0.70710677
        %v961 = vmul.f32 %v897, 0.70710677
        %v962 = vmul.f32 %v898, 0.70710677
        %v963 = verf.f32.pop %v931
        %v964 = verf.f32.pop %v932
        %v965 = verf.f32.pop %v933
        %v966 = verf.f32.pop %v934
        %v967 = verf.f32.pop %v935
        %v968 = verf.f32.pop %v936
        %v969 = verf.f32.pop %v937
        %v970 = verf.f32.pop %v938
        %v971 = verf.f32.pop %v939
        %v972 = verf.f32.pop %v940
        %v973 = verf.f32.pop %v941
        %v974 = verf.f32.pop %v942
        %v975 = verf.f32.pop %v943
        %v976 = verf.f32.pop %v944
        %v977 = verf.f32.pop %v945
        %v978 = verf.f32.pop %v946
        %v979 = verf.f32.pop %v947
        %v980 = verf.f32.pop %v948
        %v981 = verf.f32.pop %v949
        %v982 = verf.f32.pop %v950
        %v983 = verf.f32.pop %v951
        %v984 = verf.f32.pop %v952
        %v985 = verf.f32.pop %v953
        %v986 = verf.f32.pop %v954
        %v987 = verf.f32.pop %v955
        %v988 = verf.f32.pop %v956
        %v989 = verf.f32.pop %v957
        %v990 = verf.f32.pop %v958
        %v991 = verf.f32.pop %v959
        %v992 = verf.f32.pop %v960
        %v993 = verf.f32.pop %v961
        %v994 = verf.f32.pop %v962
        %v995 = vadd.f32 %v963, 1.0
        %v996 = vadd.f32 %v964, 1.0
        %v997 = vadd.f32 %v965, 1.0
        %v998 = vadd.f32 %v966, 1.0
        %v999 = vadd.f32 %v967, 1.0
        %v1000 = vadd.f32 %v968, 1.0
        %v1001 = vadd.f32 %v969, 1.0
        %v1002 = vadd.f32 %v970, 1.0
        %v1003 = vadd.f32 %v971, 1.0
        %v1004 = vadd.f32 %v972, 1.0
        %v1005 = vadd.f32 %v973, 1.0
        %v1006 = vadd.f32 %v974, 1.0
        %v1007 = vadd.f32 %v975, 1.0
        %v1008 = vadd.f32 %v976, 1.0
        %v1009 = vadd.f32 %v977, 1.0
        %v1010 = vadd.f32 %v978, 1.0
        %v1011 = vadd.f32 %v979, 1.0
        %v1012 = vadd.f32 %v980, 1.0
        %v1013 = vadd.f32 %v981, 1.0
        %v1014 = vadd.f32 %v982, 1.0
        %v1015 = vadd.f32 %v983, 1.0
        %v1016 = vadd.f32 %v984, 1.0
        %v1017 = vadd.f32 %v985, 1.0
        %v1018 = vadd.f32 %v986, 1.0
        %v1019 = vadd.f32 %v987, 1.0
        %v1020 = vadd.f32 %v988, 1.0
        %v1021 = vadd.f32 %v989, 1.0
        %v1022 = vadd.f32 %v990, 1.0
        %v1023 = vadd.f32 %v991, 1.0
        %v1024 = vadd.f32 %v992, 1.0
        %v1025 = vadd.f32 %v993, 1.0
        %v1026 = vadd.f32 %v994, 1.0
        %v1027 = vmul.f32 %v899, %v995
        %v1028 = vmul.f32 %v900, %v996
        %v1029 = vmul.f32 %v901, %v997
        %v1030 = vmul.f32 %v902, %v998
        %v1031 = vmul.f32 %v903, %v999
        %v1032 = vmul.f32 %v904, %v1000
        %v1033 = vmul.f32 %v905, %v1001
        %v1034 = vmul.f32 %v906, %v1002
        %v1035 = vmul.f32 %v907, %v1003
        %v1036 = vmul.f32 %v908, %v1004
        %v1037 = vmul.f32 %v909, %v1005
        %v1038 = vmul.f32 %v910, %v1006
        %v1039 = vmul.f32 %v911, %v1007
        %v1040 = vmul.f32 %v912, %v1008
        %v1041 = vmul.f32 %v913, %v1009
        %v1042 = vmul.f32 %v914, %v1010
        %v1043 = vmul.f32 %v915, %v1011
        %v1044 = vmul.f32 %v916, %v1012
        %v1045 = vmul.f32 %v917, %v1013
        %v1046 = vmul.f32 %v918, %v1014
        %v1047 = vmul.f32 %v919, %v1015
        %v1048 = vmul.f32 %v920, %v1016
        %v1049 = vmul.f32 %v921, %v1017
        %v1050 = vmul.f32 %v922, %v1018
        %v1051 = vmul.f32 %v923, %v1019
        %v1052 = vmul.f32 %v924, %v1020
        %v1053 = vmul.f32 %v925, %v1021
        %v1054 = vmul.f32 %v926, %v1022
        %v1055 = vmul.f32 %v927, %v1023
        %v1056 = vmul.f32 %v928, %v1024
        %v1057 = vmul.f32 %v929, %v1025
        %v1058 = vmul.f32 %v930, %v1026
        %v1059 = vpack.c.bf16 %v1029, %v1027
        %v1060 = vpack.c.bf16 %v1030, %v1028
        %v1061 = vpack.c.bf16 %v1033, %v1031
        %v1062 = vpack.c.bf16 %v1034, %v1032
        %v1063 = vpack.c.bf16 %v1037, %v1035
        %v1064 = vpack.c.bf16 %v1038, %v1036
        %v1065 = vpack.c.bf16 %v1041, %v1039
        %v1066 = vpack.c.bf16 %v1042, %v1040
        %v1067 = vpack.c.bf16 %v1045, %v1043
        %v1068 = vpack.c.bf16 %v1046, %v1044
        %v1069 = vpack.c.bf16 %v1049, %v1047
        %v1070 = vpack.c.bf16 %v1050, %v1048
        %v1071 = vpack.c.bf16 %v1053, %v1051
        %v1072 = vpack.c.bf16 %v1054, %v1052
        %v1073 = vpack.c.bf16 %v1057, %v1055
        %v1074 = vpack.c.bf16 %v1058, %v1056
        %v1075 = vld [vmem:[#allocation8] sm:$0xf]
        %v1076 = vld [vmem:[#allocation8 + $0x4] sm:$0xf]
        %v1077 = vld [vmem:[#allocation8 + $0x8] sm:$0xf]
        %v1078 = vld [vmem:[#allocation8 + $0xc] sm:$0xf]
        %v1079 = vld [vmem:[#allocation8 + $0x10] sm:$0xf]
        %v1080 = vld [vmem:[#allocation8 + $0x14] sm:$0xf]
        %v1081 = vld [vmem:[#allocation8 + $0x18] sm:$0xf]
        %v1082 = vld [vmem:[#allocation8 + $0x1c] sm:$0xf]
        %v1083 = vld [vmem:[#allocation8 + $0x20] sm:$0xf]
        %v1084 = vld [vmem:[#allocation8 + $0x24] sm:$0xf]
        %v1085 = vld [vmem:[#allocation8 + $0x28] sm:$0xf]
        %v1086 = vld [vmem:[#allocation8 + $0x2c] sm:$0xf]
        %v1087 = vld [vmem:[#allocation8 + $0x30] sm:$0xf]
        %v1088 = vld [vmem:[#allocation8 + $0x34] sm:$0xf]
        %v1089 = vld [vmem:[#allocation8 + $0x38] sm:$0xf]
        %v1090 = vld [vmem:[#allocation8 + $0x3c] sm:$0xf]
        %v1091 = vld [vmem:[#allocation8 + $0x40] sm:$0xf]
        %v1092 = vld [vmem:[#allocation8 + $0x44] sm:$0xf]
        %v1093 = vld [vmem:[#allocation8 + $0x48] sm:$0xf]
        %v1094 = vld [vmem:[#allocation8 + $0x4c] sm:$0xf]
        %v1095 = vld [vmem:[#allocation8 + $0x50] sm:$0xf]
        %v1096 = vld [vmem:[#allocation8 + $0x54] sm:$0xf]
        %v1097 = vld [vmem:[#allocation8 + $0x58] sm:$0xf]
        %v1098 = vld [vmem:[#allocation8 + $0x5c] sm:$0xf]
        %v1099 = vld [vmem:[#allocation8 + $0x60] sm:$0xf]
        %v1100 = vld [vmem:[#allocation8 + $0x64] sm:$0xf]
        %v1101 = vld [vmem:[#allocation8 + $0x68] sm:$0xf]
        %v1102 = vld [vmem:[#allocation8 + $0x6c] sm:$0xf]
        %v1103 = vld [vmem:[#allocation8 + $0x70] sm:$0xf]
        %v1104 = vld [vmem:[#allocation8 + $0x74] sm:$0xf]
        %v1105 = vld [vmem:[#allocation8 + $0x78] sm:$0xf]
        %v1106 = vld [vmem:[#allocation8 + $0x7c] sm:$0xf]
        %v1107 = vlaneseq
        %v1108 = vshrl.u32 %v1107, 7
        %v1109 = vsub.s32 0, %v1108
        %v1110 = vrot.slane %v289, %v1109
        %v1143 = vunpack.c.l.b16 %v1075
        %v1144 = vunpack.c.l.b16 %v1076
        %v1145 = vunpack.c.l.b16 %v1077
        %v1146 = vunpack.c.l.b16 %v1078
        %v1147 = vunpack.c.l.b16 %v1079
        %v1148 = vunpack.c.l.b16 %v1080
        %v1149 = vunpack.c.l.b16 %v1081
        %v1150 = vunpack.c.l.b16 %v1082
        %v1151 = vunpack.c.l.b16 %v1083
        %v1152 = vunpack.c.l.b16 %v1084
        %v1153 = vunpack.c.l.b16 %v1085
        %v1154 = vunpack.c.l.b16 %v1086
        %v1155 = vunpack.c.l.b16 %v1087
        %v1156 = vunpack.c.l.b16 %v1088
        %v1157 = vunpack.c.l.b16 %v1089
        %v1158 = vunpack.c.l.b16 %v1090
        %v1159 = vunpack.c.l.b16 %v1091
        %v1160 = vunpack.c.l.b16 %v1092
        %v1161 = vunpack.c.l.b16 %v1093
        %v1162 = vunpack.c.l.b16 %v1094
        %v1163 = vunpack.c.l.b16 %v1095
        %v1164 = vunpack.c.l.b16 %v1096
        %v1165 = vunpack.c.l.b16 %v1097
        %v1166 = vunpack.c.l.b16 %v1098
        %v1167 = vunpack.c.l.b16 %v1099
        %v1168 = vunpack.c.l.b16 %v1100
        %v1169 = vunpack.c.l.b16 %v1101
        %v1170 = vunpack.c.l.b16 %v1102
        %v1171 = vunpack.c.l.b16 %v1103
        %v1172 = vunpack.c.l.b16 %v1104
        %v1173 = vunpack.c.l.b16 %v1105
        %v1174 = vunpack.c.l.b16 %v1106
        %v1175 = vpack.c.b16 %v1144, %v1143
        %v1176 = vpack.c.b16 %v1146, %v1145
        %v1177 = vpack.c.b16 %v1148, %v1147
        %v1178 = vpack.c.b16 %v1150, %v1149
        %v1179 = vpack.c.b16 %v1152, %v1151
        %v1180 = vpack.c.b16 %v1154, %v1153
        %v1181 = vpack.c.b16 %v1156, %v1155
        %v1182 = vpack.c.b16 %v1158, %v1157
        %v1183 = vpack.c.b16 %v1160, %v1159
        %v1184 = vpack.c.b16 %v1162, %v1161
        %v1185 = vpack.c.b16 %v1164, %v1163
        %v1186 = vpack.c.b16 %v1166, %v1165
        %v1187 = vpack.c.b16 %v1168, %v1167
        %v1188 = vpack.c.b16 %v1170, %v1169
        %v1189 = vpack.c.b16 %v1172, %v1171
        %v1190 = vpack.c.b16 %v1174, %v1173
        %1207 = vmatprep.subr.bf16.mxu0 0
        %1208 = vmatpush1.bf16.msra.mxu0 %v1182
        %1209 = vmatprep.subr.bf16.mxu0 0
        %1210 = vmatpush1.bf16.msra.mxu0 %v1181
        %1211 = vmatprep.subr.bf16.mxu0 0
        %1212 = vmatpush1.bf16.msra.mxu0 %v1180
        %1213 = vmatprep.subr.bf16.mxu0 0
        %1214 = vmatpush1.bf16.msra.mxu0 %v1179
        %1215 = vmatprep.subr.bf16.mxu0 0
        %1216 = vmatpush1.bf16.msra.mxu0 %v1178
        %1217 = vmatprep.subr.bf16.mxu0 0
        %1218 = vmatpush1.bf16.msra.mxu0 %v1177
        %1219 = vmatprep.subr.bf16.mxu0 0
        %1220 = vmatpush1.bf16.msra.mxu0 %v1176
        %1221 = vmatprep.subr.bf16.mxu0 0
        %1222 = vmatpush1.bf16.msra.mxu0 %v1175
        %1223 = vmatprep.subr.bf16.mxu0 0
        %1224 = vmatpush2.bf16.msra.mxu0 %v1190
        %1225 = vmatprep.subr.bf16.mxu0 0
        %1226 = vmatpush2.bf16.msra.mxu0 %v1189
        %1227 = vmatprep.subr.bf16.mxu0 0
        %1228 = vmatpush2.bf16.msra.mxu0 %v1188
        %1229 = vmatprep.subr.bf16.mxu0 0
        %1230 = vmatpush2.bf16.msra.mxu0 %v1187
        %1231 = vmatprep.subr.bf16.mxu0 0
        %1232 = vmatpush2.bf16.msra.mxu0 %v1186
        %1233 = vmatprep.subr.bf16.mxu0 0
        %1234 = vmatpush2.bf16.msra.mxu0 %v1185
        %1235 = vmatprep.subr.bf16.mxu0 0
        %1236 = vmatpush2.bf16.msra.mxu0 %v1184
        %1237 = vmatprep.subr.bf16.mxu0 0
        %1238 = vmatpush2.bf16.msra.mxu0 %v1183
        %1239 = vmatprep.mubr.bf16.mxu0 %v1060
        %1240 = vmatmul.mubr.bf16.gmra.mxu0 %v1059
        %v1241 = vpop.f32.mrf.mxu0
        %v1242 = vadd.f32 %v1110, %v1241
        %v1243 = vpop.f32.mrf.mxu0
        %v1244 = vpop.f32.mrf.mxu0
        %v1245 = vadd.f32 %v1110, %v1244
        %v1246 = vpop.f32.mrf.mxu0
        %1247 = vmatprep.mubr.bf16.mxu0 %v1062
        %1248 = vmatmul.mubr.bf16.gmra.mxu0 %v1061
        %v1249 = vpop.f32.mrf.mxu0
        %v1250 = vadd.f32 %v1110, %v1249
        %v1251 = vpop.f32.mrf.mxu0
        %v1252 = vpop.f32.mrf.mxu0
        %v1253 = vadd.f32 %v1110, %v1252
        %v1254 = vpop.f32.mrf.mxu0
        %1255 = vmatprep.mubr.bf16.mxu0 %v1064
        %1256 = vmatmul.mubr.bf16.gmra.mxu0 %v1063
        %v1257 = vpop.f32.mrf.mxu0
        %v1258 = vadd.f32 %v1110, %v1257
        %v1259 = vpop.f32.mrf.mxu0
        %v1260 = vpop.f32.mrf.mxu0
        %v1261 = vadd.f32 %v1110, %v1260
        %v1262 = vpop.f32.mrf.mxu0
        %1263 = vmatprep.mubr.bf16.mxu0 %v1066
        %1264 = vmatmul.mubr.bf16.gmra.mxu0 %v1065
        %v1265 = vpop.f32.mrf.mxu0
        %v1266 = vadd.f32 %v1110, %v1265
        %v1267 = vpop.f32.mrf.mxu0
        %v1268 = vpop.f32.mrf.mxu0
        %v1269 = vadd.f32 %v1110, %v1268
        %v1270 = vpop.f32.mrf.mxu0
        %1271 = vmatprep.mubr.bf16.mxu0 %v1068
        %1272 = vmatmul.mubr.bf16.gmra.mxu0 %v1067
        %v1273 = vpop.f32.mrf.mxu0
        %v1274 = vadd.f32 %v1110, %v1273
        %v1275 = vpop.f32.mrf.mxu0
        %v1276 = vpop.f32.mrf.mxu0
        %v1277 = vadd.f32 %v1110, %v1276
        %v1278 = vpop.f32.mrf.mxu0
        %1279 = vmatprep.mubr.bf16.mxu0 %v1070
        %1280 = vmatmul.mubr.bf16.gmra.mxu0 %v1069
        %v1281 = vpop.f32.mrf.mxu0
        %v1282 = vadd.f32 %v1110, %v1281
        %v1283 = vpop.f32.mrf.mxu0
        %v1284 = vpop.f32.mrf.mxu0
        %v1285 = vadd.f32 %v1110, %v1284
        %v1286 = vpop.f32.mrf.mxu0
        %1287 = vmatprep.mubr.bf16.mxu0 %v1072
        %1288 = vmatmul.mubr.bf16.gmra.mxu0 %v1071
        %v1289 = vpop.f32.mrf.mxu0
        %v1290 = vadd.f32 %v1110, %v1289
        %v1291 = vpop.f32.mrf.mxu0
        %v1292 = vpop.f32.mrf.mxu0
        %v1293 = vadd.f32 %v1110, %v1292
        %v1294 = vpop.f32.mrf.mxu0
        %1295 = vmatprep.mubr.bf16.mxu0 %v1074
        %1296 = vmatmul.mubr.bf16.gmra.mxu0 %v1073
        %v1297 = vpop.f32.mrf.mxu0
        %v1298 = vadd.f32 %v1110, %v1297
        %v1299 = vpop.f32.mrf.mxu0
        %v1300 = vpop.f32.mrf.mxu0
        %v1301 = vadd.f32 %v1110, %v1300
        %v1302 = vpop.f32.mrf.mxu0
        %1303 = vdwg.mxu0
        %1304 = vadd.xlane.f32.xlu0 %v1242
        %v1305 = vpop.xlane.xlu0 %1304
        %1306 = vadd.xlane.f32.xlu0 %v1245
        %v1307 = vpop.xlane.xlu0 %1306
        %1308 = vadd.xlane.f32.xlu0 %v1250
        %v1309 = vpop.xlane.xlu0 %1308
        %1310 = vadd.xlane.f32.xlu0 %v1253
        %v1311 = vpop.xlane.xlu0 %1310
        %1312 = vadd.xlane.f32.xlu0 %v1258
        %v1313 = vpop.xlane.xlu0 %1312
        %1314 = vadd.xlane.f32.xlu0 %v1261
        %v1315 = vpop.xlane.xlu0 %1314
        %1316 = vadd.xlane.f32.xlu0 %v1266
        %v1317 = vpop.xlane.xlu0 %1316
        %1318 = vadd.xlane.f32.xlu0 %v1269
        %v1319 = vpop.xlane.xlu0 %1318
        %1320 = vadd.xlane.f32.xlu0 %v1274
        %v1321 = vpop.xlane.xlu0 %1320
        %1322 = vadd.xlane.f32.xlu0 %v1277
        %v1323 = vpop.xlane.xlu0 %1322
        %1324 = vadd.xlane.f32.xlu0 %v1282
        %v1325 = vpop.xlane.xlu0 %1324
        %1326 = vadd.xlane.f32.xlu0 %v1285
        %v1327 = vpop.xlane.xlu0 %1326
        %1328 = vadd.xlane.f32.xlu0 %v1290
        %v1329 = vpop.xlane.xlu0 %1328
        %1330 = vadd.xlane.f32.xlu0 %v1293
        %v1331 = vpop.xlane.xlu0 %1330
        %1332 = vadd.xlane.f32.xlu0 %v1298
        %v1333 = vpop.xlane.xlu0 %1332
        %1334 = vadd.xlane.f32.xlu0 %v1301
        %v1335 = vpop.xlane.xlu0 %1334
        %v1336 = vrcp.pop 128.0
        %v1337 = vmul.f32 %v1305, %v1336
        %v1338 = vmul.f32 %v1307, %v1336
        %v1339 = vmul.f32 %v1309, %v1336
        %v1340 = vmul.f32 %v1311, %v1336
        %v1341 = vmul.f32 %v1313, %v1336
        %v1342 = vmul.f32 %v1315, %v1336
        %v1343 = vmul.f32 %v1317, %v1336
        %v1344 = vmul.f32 %v1319, %v1336
        %v1345 = vmul.f32 %v1321, %v1336
        %v1346 = vmul.f32 %v1323, %v1336
        %v1347 = vmul.f32 %v1325, %v1336
        %v1348 = vmul.f32 %v1327, %v1336
        %v1349 = vmul.f32 %v1329, %v1336
        %v1350 = vmul.f32 %v1331, %v1336
        %v1351 = vmul.f32 %v1333, %v1336
        %v1352 = vmul.f32 %v1335, %v1336
        %v1353 = vsub.f32 %v1242, %v1337
        %v1354 = vsub.f32 %v1245, %v1338
        %v1355 = vsub.f32 %v1250, %v1339
        %v1356 = vsub.f32 %v1253, %v1340
        %v1357 = vsub.f32 %v1258, %v1341
        %v1358 = vsub.f32 %v1261, %v1342
        %v1359 = vsub.f32 %v1266, %v1343
        %v1360 = vsub.f32 %v1269, %v1344
        %v1361 = vsub.f32 %v1274, %v1345
        %v1362 = vsub.f32 %v1277, %v1346
        %v1363 = vsub.f32 %v1282, %v1347
        %v1364 = vsub.f32 %v1285, %v1348
        %v1365 = vsub.f32 %v1290, %v1349
        %v1366 = vsub.f32 %v1293, %v1350
        %v1367 = vsub.f32 %v1298, %v1351
        %v1368 = vsub.f32 %v1301, %v1352
        %v1369 = vmul.f32 %v1353, %v1353
        %v1370 = vmul.f32 %v1354, %v1354
        %v1371 = vmul.f32 %v1355, %v1355
        %v1372 = vmul.f32 %v1356, %v1356
        %v1373 = vmul.f32 %v1357, %v1357
        %v1374 = vmul.f32 %v1358, %v1358
        %v1375 = vmul.f32 %v1359, %v1359
        %v1376 = vmul.f32 %v1360, %v1360
        %v1377 = vmul.f32 %v1361, %v1361
        %v1378 = vmul.f32 %v1362, %v1362
        %v1379 = vmul.f32 %v1363, %v1363
        %v1380 = vmul.f32 %v1364, %v1364
        %v1381 = vmul.f32 %v1365, %v1365
        %v1382 = vmul.f32 %v1366, %v1366
        %v1383 = vmul.f32 %v1367, %v1367
        %v1384 = vmul.f32 %v1368, %v1368
        %1385 = vadd.xlane.f32.xlu0 %v1369
        %v1386 = vpop.xlane.xlu0 %1385
        %1387 = vadd.xlane.f32.xlu0 %v1370
        %v1388 = vpop.xlane.xlu0 %1387
        %1389 = vadd.xlane.f32.xlu0 %v1371
        %v1390 = vpop.xlane.xlu0 %1389
        %1391 = vadd.xlane.f32.xlu0 %v1372
        %v1392 = vpop.xlane.xlu0 %1391
        %1393 = vadd.xlane.f32.xlu0 %v1373
        %v1394 = vpop.xlane.xlu0 %1393
        %1395 = vadd.xlane.f32.xlu0 %v1374
        %v1396 = vpop.xlane.xlu0 %1395
        %1397 = vadd.xlane.f32.xlu0 %v1375
        %v1398 = vpop.xlane.xlu0 %1397
        %1399 = vadd.xlane.f32.xlu0 %v1376
        %v1400 = vpop.xlane.xlu0 %1399
        %1401 = vadd.xlane.f32.xlu0 %v1377
        %v1402 = vpop.xlane.xlu0 %1401
        %1403 = vadd.xlane.f32.xlu0 %v1378
        %v1404 = vpop.xlane.xlu0 %1403
        %1405 = vadd.xlane.f32.xlu0 %v1379
        %v1406 = vpop.xlane.xlu0 %1405
        %1407 = vadd.xlane.f32.xlu0 %v1380
        %v1408 = vpop.xlane.xlu0 %1407
        %1409 = vadd.xlane.f32.xlu0 %v1381
        %v1410 = vpop.xlane.xlu0 %1409
        %1411 = vadd.xlane.f32.xlu0 %v1382
        %v1412 = vpop.xlane.xlu0 %1411
        %1413 = vadd.xlane.f32.xlu0 %v1383
        %v1414 = vpop.xlane.xlu0 %1413
        %1415 = vadd.xlane.f32.xlu0 %v1384
        %v1416 = vpop.xlane.xlu0 %1415
        %v1417 = vmul.f32 %v1386, %v1336
        %v1418 = vmul.f32 %v1388, %v1336
        %v1419 = vmul.f32 %v1390, %v1336
        %v1420 = vmul.f32 %v1392, %v1336
        %v1421 = vmul.f32 %v1394, %v1336
        %v1422 = vmul.f32 %v1396, %v1336
        %v1423 = vmul.f32 %v1398, %v1336
        %v1424 = vmul.f32 %v1400, %v1336
        %v1425 = vmul.f32 %v1402, %v1336
        %v1426 = vmul.f32 %v1404, %v1336
        %v1427 = vmul.f32 %v1406, %v1336
        %v1428 = vmul.f32 %v1408, %v1336
        %v1429 = vmul.f32 %v1410, %v1336
        %v1430 = vmul.f32 %v1412, %v1336
        %v1431 = vmul.f32 %v1414, %v1336
        %v1432 = vmul.f32 %v1416, %v1336
        %v1433 = vadd.f32 %v1417, 1e-05
        %v1434 = vadd.f32 %v1418, 1e-05
        %v1435 = vadd.f32 %v1419, 1e-05
        %v1436 = vadd.f32 %v1420, 1e-05
        %v1437 = vadd.f32 %v1421, 1e-05
        %v1438 = vadd.f32 %v1422, 1e-05
        %v1439 = vadd.f32 %v1423, 1e-05
        %v1440 = vadd.f32 %v1424, 1e-05
        %v1441 = vadd.f32 %v1425, 1e-05
        %v1442 = vadd.f32 %v1426, 1e-05
        %v1443 = vadd.f32 %v1427, 1e-05
        %v1444 = vadd.f32 %v1428, 1e-05
        %v1445 = vadd.f32 %v1429, 1e-05
        %v1446 = vadd.f32 %v1430, 1e-05
        %v1447 = vadd.f32 %v1431, 1e-05
        %v1448 = vadd.f32 %v1432, 1e-05
        %v1449 = vrsqrt.pop %v1433
        %v1450 = vrsqrt.pop %v1434
        %v1451 = vrsqrt.pop %v1435
        %v1452 = vrsqrt.pop %v1436
        %v1453 = vrsqrt.pop %v1437
        %v1454 = vrsqrt.pop %v1438
        %v1455 = vrsqrt.pop %v1439
        %v1456 = vrsqrt.pop %v1440
        %v1457 = vrsqrt.pop %v1441
        %v1458 = vrsqrt.pop %v1442
        %v1459 = vrsqrt.pop %v1443
        %v1460 = vrsqrt.pop %v1444
        %v1461 = vrsqrt.pop %v1445
        %v1462 = vrsqrt.pop %v1446
        %v1463 = vrsqrt.pop %v1447
        %v1464 = vrsqrt.pop %v1448
        %v1465 = vmul.f32 %v1353, %v1449
        %v1466 = vmul.f32 %v1354, %v1450
        %v1467 = vmul.f32 %v1355, %v1451
        %v1468 = vmul.f32 %v1356, %v1452
        %v1469 = vmul.f32 %v1357, %v1453
        %v1470 = vmul.f32 %v1358, %v1454
        %v1471 = vmul.f32 %v1359, %v1455
        %v1472 = vmul.f32 %v1360, %v1456
        %v1473 = vmul.f32 %v1361, %v1457
        %v1474 = vmul.f32 %v1362, %v1458
        %v1475 = vmul.f32 %v1363, %v1459
        %v1476 = vmul.f32 %v1364, %v1460
        %v1477 = vmul.f32 %v1365, %v1461
        %v1478 = vmul.f32 %v1366, %v1462
        %v1479 = vmul.f32 %v1367, %v1463
        %v1480 = vmul.f32 %v1368, %v1464
        %v1481 = vlaneseq
        %v1482 = vshrl.u32 %v1481, 7
        %v1483 = vsub.s32 1, %v1482
        %v1484 = vrot.slane %v289, %v1483
        %v1485 = vmul.f32 %v1465, %v1484
        %v1486 = vmul.f32 %v1466, %v1484
        %v1487 = vmul.f32 %v1467, %v1484
        %v1488 = vmul.f32 %v1468, %v1484
        %v1489 = vmul.f32 %v1469, %v1484
        %v1490 = vmul.f32 %v1470, %v1484
        %v1491 = vmul.f32 %v1471, %v1484
        %v1492 = vmul.f32 %v1472, %v1484
        %v1493 = vmul.f32 %v1473, %v1484
        %v1494 = vmul.f32 %v1474, %v1484
        %v1495 = vmul.f32 %v1475, %v1484
        %v1496 = vmul.f32 %v1476, %v1484
        %v1497 = vmul.f32 %v1477, %v1484
        %v1498 = vmul.f32 %v1478, %v1484
        %v1499 = vmul.f32 %v1479, %v1484
        %v1500 = vmul.f32 %v1480, %v1484
        %v1501 = vlaneseq
        %v1502 = vshrl.u32 %v1501, 7
        %v1503 = vsub.s32 2, %v1502
        %v1504 = vrot.slane %v289, %v1503
        %v1505 = vadd.f32 %v1485, %v1504
        %v1506 = vadd.f32 %v1486, %v1504
        %v1507 = vadd.f32 %v1487, %v1504
        %v1508 = vadd.f32 %v1488, %v1504
        %v1509 = vadd.f32 %v1489, %v1504
        %v1510 = vadd.f32 %v1490, %v1504
        %v1511 = vadd.f32 %v1491, %v1504
        %v1512 = vadd.f32 %v1492, %v1504
        %v1513 = vadd.f32 %v1493, %v1504
        %v1514 = vadd.f32 %v1494, %v1504
        %v1515 = vadd.f32 %v1495, %v1504
        %v1516 = vadd.f32 %v1496, %v1504
        %v1517 = vadd.f32 %v1497, %v1504
        %v1518 = vadd.f32 %v1498, %v1504
        %v1519 = vadd.f32 %v1499, %v1504
        %v1520 = vadd.f32 %v1500, %v1504
        %v1521 = vadd.f32 %v290, %v1505
        %v1522 = vadd.f32 %v291, %v1506
        %v1523 = vadd.f32 %v292, %v1507
        %v1524 = vadd.f32 %v293, %v1508
        %v1525 = vadd.f32 %v294, %v1509
        %v1526 = vadd.f32 %v295, %v1510
        %v1527 = vadd.f32 %v296, %v1511
        %v1528 = vadd.f32 %v297, %v1512
        %v1529 = vadd.f32 %v298, %v1513
        %v1530 = vadd.f32 %v299, %v1514
        %v1531 = vadd.f32 %v300, %v1515
        %v1532 = vadd.f32 %v301, %v1516
        %v1533 = vadd.f32 %v302, %v1517
        %v1534 = vadd.f32 %v303, %v1518
        %v1535 = vadd.f32 %v304, %v1519
        %v1536 = vadd.f32 %v305, %v1520
        %1537 = vst [vmem:[%s284] sm:$0xff] %v1521
        %1538 = vst [vmem:[%s284 + $0x8] sm:$0xff] %v1522
        %1539 = vst [vmem:[%s284 + $0x10] sm:$0xff] %v1523
        %1540 = vst [vmem:[%s284 + $0x18] sm:$0xff] %v1524
        %1541 = vst [vmem:[%s284 + $0x20] sm:$0xff] %v1525
        %1542 = vst [vmem:[%s284 + $0x28] sm:$0xff] %v1526
        %1543 = vst [vmem:[%s284 + $0x30] sm:$0xff] %v1527
        %1544 = vst [vmem:[%s284 + $0x38] sm:$0xff] %v1528
        %1545 = vst [vmem:[%s284 + $0x40] sm:$0xff] %v1529
        %1546 = vst [vmem:[%s284 + $0x48] sm:$0xff] %v1530
        %1547 = vst [vmem:[%s284 + $0x50] sm:$0xff] %v1531
        %1548 = vst [vmem:[%s284 + $0x58] sm:$0xff] %v1532
        %1549 = vst [vmem:[%s284 + $0x60] sm:$0xff] %v1533
        %1550 = vst [vmem:[%s284 + $0x68] sm:$0xff] %v1534
        %1551 = vst [vmem:[%s284 + $0x70] sm:$0xff] %v1535
        %1552 = vst [vmem:[%s284 + $0x78] sm:$0xff] %v1536
        %s1553 = sand.u32 %s142, 1
        %s1554 = scalar_lea.sflag [#allocation4], %s1553
        %s1555 = sand.u32 %s142, 1
        %s1556 = smul.addr %s1555, 128
        %s1557 = scalar_lea.vmem [#allocation10], %s1556
        // Predicated region
        $region57: #{residual_block.1} parent=39 // pred_check
          %p1558 = pneg %p152
        $region58: #{residual_block.1} parent=39 // pred_check_branch
          %1560 = sbr.rel (%p1558) target = $region60
        $region59: #{residual_block.1} parent=39 // pred_region
          %s1561 = smul.u32 16, %s24
          %s1563 = ssub.s32 2048, 2048
          %1564 = vsyncadd %s1554, %s1563
          %s1565 = smul.addr %s1561, 128
          %s1566 = scalar_lea.hbm %s5, %s1565
          %s1567 = sshll.u32 %s1557, 4
          %s1568 = int_to_ptr.vmem [resolvable:$true] %s1567
          %1573 = dma.vmem_to_hbm [thread:$0]  %s1568, 2048, %s1566, %s1554, 128, 128, 8
        $region60: #{residual_block.1} parent=39 // pred_fallthru
          _
      $region40: #{residual_block.1} parent=5 // pred_fallthru
        _
      %p1574 = scmp.le.s32.totalorder 2, %s19
      // Predicated region
      $region61: #{residual_block.1} parent=5 // pred_check
        %p1575 = pneg %p1574
      $region62: #{residual_block.1} parent=5 // pred_check_branch
        %1577 = sbr.rel (%p1575) target = $region64
      $region63: #{residual_block.1} parent=5 // pred_region
        %s1578 = ssub.s32 %s19, 2
        // Predicated region
        $region65: #{residual_block.1} parent=63 // pred_check
          %p1579 = pneg %p158
        $region66: #{residual_block.1} parent=63 // pred_check_branch
          %1581 = sbr.rel (%p1579) target = $region68
        $region67: #{residual_block.1} parent=63 // pred_region
          %s1582 = sand.u32 %s143, 1
          %s1583 = scalar_lea.sflag [#allocation4], %s1582
          %s1584 = sand.u32 %s143, 1
          %s1585 = smul.addr %s1584, 128
          %s1586 = scalar_lea.vmem [#allocation10], %s1585
          %1587 = dma.done %s1583, 2048
        $region68: #{residual_block.1} parent=63 // pred_fallthru
          _
      $region64: #{residual_block.1} parent=5 // pred_fallthru
        _
    $region6: #{residual_block.1} parent=1 // loop_footer
      %s23 = sadd.s32 1, %s19
    $region7: #{residual_block.1} parent=1 // loop_footer_branch
      %18 = sbr.rel target = $region3
    $region8: #{residual_block.1} parent=1 // loop_exit
      _
    %1588 = vsyncpa [#allocation3], 1
    %s1589 = scalar_lea.sflag [#allocation3], 1
    %1590 = vsyncpa %s1589, 1
    %1591 = vsyncpa [#allocation6], 1
    %1592 = vsyncpa [#allocation9], 1
    %1593 = vsyncpa [#allocation4], 1
    %s1594 = scalar_lea.sflag [#allocation4], 1
    %1595 = vsyncpa %s1594, 1

</llo_original>
